<compile_context>
chip_gen: v6e
topology: v6e:2x2x1
jax: 0.10.0
libtpu: 0.0.40
codegen_flags: <defaults>
</compile_context>

<pallas_src>
import functools

import jax
import jax.numpy as jnp
from jax.experimental import pallas as pl
from jax.experimental.pallas import tpu as pltpu


def _round_up(a, m):
    return ((a + m - 1) // m) * m


def _cdiv(a, b):
    return (a + b - 1) // b


def _ddx_fused_kernel(x_cur_ref, x_halo_ref, w1_ref, w2_ref, b1_ref, b2_ref,
                      o_ref, h1_ref, *, dilation, pad, seq_len, tl):
    """One (batch, L-tile) step of the fused DDx block.

    x_cur_ref:  (1, C_in, TL)       current input tile (zero padded at edges)
    x_halo_ref: (1, C_in, HB)       right-halo slab (starts at next tile)
    w1_ref:     (K, C_mid, C_in)    conv1 weights, one matrix per tap
    w2_ref:     (K, C_out, C_mid)   conv2 weights, one matrix per tap
    b1_ref:     (C_mid, 1), b2_ref: (C_out, 1)
    o_ref:      (1, C_out + C_in, TL)  fused output tile (h2 rows, then x rows)
    h1_ref:     (C_mid, TL + span)  VMEM scratch holding relu(h1) for this tile
    """
    d = dilation
    K = w1_ref.shape[0]
    span = (K - 1) * d                # per-conv receptive halo (2d for K=3)
    h_left = 2 * pad                  # left x-halo used by this tile
    w1_cols = tl + span               # h1 columns needed by conv2 (incl. halo)

    t0 = pl.program_id(1) * tl        # absolute output position of column 0

    # --- x window (C_in, TL + 2*span): current tile + halo from the next slab.
    xw = jnp.concatenate([x_cur_ref[0], x_halo_ref[0, :, :2 * span]], axis=-1)
    xr = jnp.maximum(xw, 0.0)         # cnn1's ReLU (zero padding stays zero)

    # --- conv1 (C_in -> 128): one MXU matmul per tap, f32 accumulation.
    # TODO(synk): the K taps could be folded into a single K*C_in-contraction
    # matmul (im2col stack); conv1 is <10% of the MXU work so left per-tap.
    h1 = jnp.dot(w1_ref[0], xr[:, 0:w1_cols],
                 preferred_element_type=jnp.float32)
    for j in range(1, K):
        h1 = h1 + jnp.dot(w1_ref[j], xr[:, j * d:j * d + w1_cols],
                          preferred_element_type=jnp.float32)
    h1 = h1 + b1_ref[...]             # (C_mid, 1) broadcast over lanes

    # cnn2's ReLU, plus zeroing of columns outside [0, L): those columns are
    # conv2's zero padding, NOT conv1 applied to zero-padded x.
    col = jax.lax.broadcasted_iota(jnp.int32, (1, w1_cols), 1)
    pos = col + (t0 - pad)
    valid = (pos >= 0) & (pos < seq_len)
    h1_ref[...] = jnp.where(valid, jnp.maximum(h1, 0.0), 0.0)

    # --- conv2 (128 -> 32): per-tap MXU matmuls, ref-level shifted loads from
    # the VMEM scratch (avoids value-level relayouts of the 128-ch stream).
    # TODO(synk): on v6e/v7x the 3 taps could be fused into one K=384 matmul.
    acc = jnp.dot(w2_ref[0], h1_ref[:, 0:tl],
                  preferred_element_type=jnp.float32)
    for k in range(1, K):
        acc = acc + jnp.dot(w2_ref[k], h1_ref[:, k * d:k * d + tl],
                            preferred_element_type=jnp.float32)
    acc = acc + b2_ref[...]

    # --- fused concat: h2 into channels [0, 32), original (un-ReLU'd) x after.
    o_tile = jnp.concatenate([acc, xw[:, h_left:h_left + tl]], axis=0)
    o_ref[0] = o_tile.astype(o_ref.dtype)


def ddx_block_forward(x_ncl, params, *, dilation=1, causal=False, tl_max=1024):
    """DDx_block forward: (N, C_in, L) -> (N, 32 + C_in, L), one pallas_call."""
    N, C_in, L = x_ncl.shape
    w1, w2, b1, b2 = params["w1"], params["w2"], params["b1"], params["b2"]
    C_mid, C_in_w, K = w1.shape
    C_out = w2.shape[0]
    assert C_in_w == C_in and w2.shape[1] == C_mid and w2.shape[2] == K

    d = dilation
    span = (K - 1) * d
    pad = span if causal else span // 2
    h_left = 2 * pad                      # x halo to the left of an output tile
    halo = 2 * span                       # total x halo per tile (4d for K=3)

    # L-tile size: multiple of 128, big enough to contain the halo, <= tl_max.
    tl = min(_round_up(max(tl_max, 128), 128), _round_up(L, 128))
    tl = max(tl, _round_up(halo, 128))
    n_lt = _cdiv(L, tl)
    l_out = n_lt * tl

    # Right-halo source: a narrow 128-wide slab of the next tile when the halo
    # fits (common case), otherwise a full tile (only for huge dilations).
    hb = 128 if halo <= 128 else tl
    ratio = tl // hb

    # Zero-pad x once (cheap: only C_in channels): h_left zeros on the left for
    # the conv boundary, zeros on the right so every tile + its halo slab is
    # always in range.
    lp_in = n_lt * tl + hb
    x_pad = jnp.pad(x_ncl, ((0, 0), (0, 0), (h_left, lp_in - h_left - L)))

    w1_k = jnp.transpose(w1, (2, 0, 1))   # (K, C_mid, C_in)
    w2_k = jnp.transpose(w2, (2, 0, 1))   # (K, C_out, C_mid)
    b1c = b1.reshape(C_mid, 1)
    b2c = b2.reshape(C_out, 1)

    kernel = functools.partial(_ddx_fused_kernel, dilation=d, pad=pad,
                               seq_len=L, tl=tl)

    out = pl.pallas_call(
        kernel,
        out_shape=jax.ShapeDtypeStruct((N, C_out + C_in, l_out), x_ncl.dtype),
        grid_spec=pltpu.PrefetchScalarGridSpec(
            num_scalar_prefetch=0,
            grid=(N, n_lt),
            in_specs=[
                pl.BlockSpec((1, C_in, tl), lambda n, t: (n, 0, t)),      # x tile
                pl.BlockSpec((1, C_in, hb),
                             lambda n, t: (n, 0, (t + 1) * ratio)),       # x halo
                pl.BlockSpec((K, C_mid, C_in), lambda n, t: (0, 0, 0)),   # w1
                pl.BlockSpec((K, C_out, C_mid), lambda n, t: (0, 0, 0)),  # w2
                pl.BlockSpec((C_mid, 1), lambda n, t: (0, 0)),            # b1
                pl.BlockSpec((C_out, 1), lambda n, t: (0, 0)),            # b2
            ],
            out_specs=pl.BlockSpec((1, C_out + C_in, tl), lambda n, t: (n, 0, t)),
            scratch_shapes=[pltpu.VMEM((C_mid, tl + span), jnp.float32)],
        ),
        compiler_params=pltpu.CompilerParams(
            dimension_semantics=("parallel", "parallel")),
    )(x_pad, x_pad, w1_k, w2_k, b1c, b2c)

    return out if l_out == L else out[:, :, :L]


def _reference_forward(x_ncl, params, *, dilation=1, causal=False):
    """Independent pure-JAX reference (lax.conv) mirroring the PyTorch module."""
    ker_size = 3
    pad = (ker_size - 1) * dilation if causal else (ker_size - 1) * dilation // 2

    def rc(x, w, b):
        h = jnp.maximum(x, 0.0)
        y = jax.lax.conv_general_dilated(
            h, w, window_strides=(1,), padding=[(pad, pad)],
            rhs_dilation=(dilation,), dimension_numbers=("NCH", "OIH", "NCH"))
        return y + b[None, :, None]

    h = rc(x_ncl, params["w1"], params["b1"])
    if causal:
        h = h[:, :, :h.shape[2] - pad]
    h = rc(h, params["w2"], params["b2"])
    if causal:
        h = h[:, :, :h.shape[2] - pad]
    return jnp.concatenate([h, x_ncl], axis=1)


def init_params(key, in_channels, ker_size=3):
    k1, k2, k3, k4 = jax.random.split(key, 4)
    scale1 = 1.0 / (in_channels * ker_size) ** 0.5
    scale2 = 1.0 / (128 * ker_size) ** 0.5
    return {
        "w1": jax.random.uniform(k1, (128, in_channels, ker_size),
                                 jnp.float32, -scale1, scale1),
        "b1": jax.random.uniform(k2, (128,), jnp.float32, -scale1, scale1),
        "w2": jax.random.uniform(k3, (32, 128, ker_size),
                                 jnp.float32, -scale2, scale2),
        "b2": jax.random.uniform(k4, (32,), jnp.float32, -scale2, scale2),
    }


if __name__ == "__main__":
    key = jax.random.PRNGKey(0)
    kx, kp = jax.random.split(key)

    # Shapes implied by the module: batch=2, in_channels=4, seq length=16.
    N, C_in, L = 2, 4, 16
    x = jax.random.normal(kx, (N, C_in, L), jnp.float32)
    params = init_params(kp, C_in)

    out = ddx_block_forward(x, params, dilation=1, causal=False)
    out = jax.block_until_ready(out)
    assert out.shape == (N, 32 + C_in, L), out.shape
    ref = _reference_forward(x, params, dilation=1, causal=False)
    assert jnp.allclose(out, ref, rtol=1e-4, atol=1e-4), "mismatch vs reference"

    # Extra checks: multi-tile L (exercises halo/masking), dilation, causal,
    # and one huge dilation that exercises the wide-halo fallback path.
    for (Lx, dil, caus, tlm) in [(300, 1, False, 128), (300, 2, False, 128),
                                 (300, 2, True, 128), (257, 3, True, 128),
                                 (300, 33, False, 128)]:
        xx = jax.random.normal(jax.random.fold_in(kx, 7 * Lx + dil),
                               (N, C_in, Lx), jnp.float32)
        o = ddx_block_forward(xx, params, dilation=dil, causal=caus, tl_max=tlm)
        o = jax.block_until_ready(o)
        r = _reference_forward(xx, params, dilation=dil, causal=caus)
        assert o.shape == r.shape, (o.shape, r.shape)
        assert jnp.allclose(o, r, rtol=1e-4, atol=1e-4), (Lx, dil, caus)

    print("KERNEL_OK")
</pallas_src>

<mosaic_0001>
module attributes {stable_mosaic.version = 11 : i64} {
  func.func @_ddx_fused_kernel(%arg0: i32, %arg1: i32, %arg2: memref<1x4x128xf32, #tpu.memory_space<vmem>>, %arg3: memref<1x4x128xf32, #tpu.memory_space<vmem>>, %arg4: memref<3x128x4xf32, #tpu.memory_space<vmem>>, %arg5: memref<3x32x128xf32, #tpu.memory_space<vmem>>, %arg6: memref<128x1xf32, #tpu.memory_space<vmem>>, %arg7: memref<32x1xf32, #tpu.memory_space<vmem>>, %arg8: memref<1x36x128xf32, #tpu.memory_space<vmem>>, %arg9: memref<128x130xf32, #tpu.memory_space<vmem>>) attributes {dimension_semantics = [#tpu.dimension_semantics<parallel>, #tpu.dimension_semantics<parallel>], iteration_bounds = array<i64: 2, 1>, scalar_prefetch = 0 : i64, scratch_operands = 1 : i64, tpu.core_type = #tpu.core_type<tc>, window_params = [{transform_indices = @transform_0, window_bounds = array<i64: 1, 4, 128>}, {transform_indices = @transform_1, window_bounds = array<i64: 1, 4, 128>}, {pipeline_mode = #tpu.pipeline_mode<synchronous>, transform_indices = @transform_2, window_bounds = array<i64: 3, 128, 4>}, {pipeline_mode = #tpu.pipeline_mode<synchronous>, transform_indices = @transform_3, window_bounds = array<i64: 3, 32, 128>}, {pipeline_mode = #tpu.pipeline_mode<synchronous>, transform_indices = @transform_4, window_bounds = array<i64: 128, 1>}, {pipeline_mode = #tpu.pipeline_mode<synchronous>, transform_indices = @transform_5, window_bounds = array<i64: 32, 1>}, {transform_indices = @transform_6, window_bounds = array<i64: 1, 36, 128>}]} {
    %c128_i32 = arith.constant 128 : i32
    %0 = arith.muli %arg1, %c128_i32 : i32
    %c0 = arith.constant 0 : index
    %c0_0 = arith.constant 0 : index
    %c0_1 = arith.constant 0 : index
    %1 = vector.load %arg2[%c0, %c0_0, %c0_1] : memref<1x4x128xf32, #tpu.memory_space<vmem>>, vector<1x4x128xf32>
    %2 = vector.shape_cast %1 : vector<1x4x128xf32> to vector<4x128xf32>
    %c0_2 = arith.constant 0 : index
    %c0_3 = arith.constant 0 : index
    %c0_4 = arith.constant 0 : index
    %3 = vector.load %arg3[%c0_2, %c0_3, %c0_4] : memref<1x4x128xf32, #tpu.memory_space<vmem>>, vector<1x4x4xf32>
    %4 = vector.shape_cast %3 : vector<1x4x4xf32> to vector<4x4xf32>
    %5 = tpu.concatenate %2, %4 in 1 : vector<4x128xf32>, vector<4x4xf32> -> vector<4x132xf32>
    %cst = arith.constant 0.000000e+00 : f32
    %6 = vector.broadcast %cst : f32 to vector<4x132xf32>
    %7 = arith.maximumf %5, %6 : vector<4x132xf32>
    %c0_5 = arith.constant 0 : index
    %c0_6 = arith.constant 0 : index
    %c0_7 = arith.constant 0 : index
    %8 = vector.load %arg4[%c0_5, %c0_6, %c0_7] : memref<3x128x4xf32, #tpu.memory_space<vmem>>, vector<1x128x4xf32>
    %9 = vector.shape_cast %8 : vector<1x128x4xf32> to vector<128x4xf32>
    %10 = vector.extract_strided_slice %7 {offsets = [0, 0], sizes = [4, 130], strides = [1, 1]} : vector<4x132xf32> to vector<4x130xf32>
    %cst_8 = arith.constant dense<0.000000e+00> : vector<128x130xf32>
    %11 = tpu.matmul %9, %10, %cst_8 {dimension_numbers = #tpu.dot_dimension_numbers<[1], [0], [0], [1], [0, 0, 1, 1], [], []>} : vector<128x4xf32>, vector<4x130xf32>, vector<128x130xf32> -> vector<128x130xf32>
    %c1 = arith.constant 1 : index
    %c0_9 = arith.constant 0 : index
    %c0_10 = arith.constant 0 : index
    %12 = vector.load %arg4[%c1, %c0_9, %c0_10] : memref<3x128x4xf32, #tpu.memory_space<vmem>>, vector<1x128x4xf32>
    %13 = vector.shape_cast %12 : vector<1x128x4xf32> to vector<128x4xf32>
    %14 = vector.extract_strided_slice %7 {offsets = [0, 1], sizes = [4, 130], strides = [1, 1]} : vector<4x132xf32> to vector<4x130xf32>
    %cst_11 = arith.constant dense<0.000000e+00> : vector<128x130xf32>
    %15 = tpu.matmul %13, %14, %cst_11 {dimension_numbers = #tpu.dot_dimension_numbers<[1], [0], [0], [1], [0, 0, 1, 1], [], []>} : vector<128x4xf32>, vector<4x130xf32>, vector<128x130xf32> -> vector<128x130xf32>
    %16 = arith.addf %11, %15 : vector<128x130xf32>
    %c2 = arith.constant 2 : index
    %c0_12 = arith.constant 0 : index
    %c0_13 = arith.constant 0 : index
    %17 = vector.load %arg4[%c2, %c0_12, %c0_13] : memref<3x128x4xf32, #tpu.memory_space<vmem>>, vector<1x128x4xf32>
    %18 = vector.shape_cast %17 : vector<1x128x4xf32> to vector<128x4xf32>
    %19 = vector.extract_strided_slice %7 {offsets = [0, 2], sizes = [4, 130], strides = [1, 1]} : vector<4x132xf32> to vector<4x130xf32>
    %cst_14 = arith.constant dense<0.000000e+00> : vector<128x130xf32>
    %20 = tpu.matmul %18, %19, %cst_14 {dimension_numbers = #tpu.dot_dimension_numbers<[1], [0], [0], [1], [0, 0, 1, 1], [], []>} : vector<128x4xf32>, vector<4x130xf32>, vector<128x130xf32> -> vector<128x130xf32>
    %21 = arith.addf %16, %20 : vector<128x130xf32>
    %c0_15 = arith.constant 0 : index
    %c0_16 = arith.constant 0 : index
    %22 = vector.load %arg6[%c0_15, %c0_16] : memref<128x1xf32, #tpu.memory_space<vmem>>, vector<128x1xf32>
    %23 = vector.broadcast %22 : vector<128x1xf32> to vector<128x130xf32>
    %24 = arith.addf %21, %23 : vector<128x130xf32>
    %25 = tpu.iota {dimensions = array<i32: 1>} : vector<1x130xi32>
    %c1_i32 = arith.constant 1 : i32
    %26 = arith.subi %0, %c1_i32 : i32
    %27 = vector.broadcast %26 : i32 to vector<1x130xi32>
    %28 = arith.addi %25, %27 : vector<1x130xi32>
    %c0_i32 = arith.constant 0 : i32
    %29 = vector.broadcast %c0_i32 : i32 to vector<1x130xi32>
    %30 = arith.cmpi sge, %28, %29 : vector<1x130xi32>
    %c16_i32 = arith.constant 16 : i32
    %31 = vector.broadcast %c16_i32 : i32 to vector<1x130xi32>
    %32 = arith.cmpi slt, %28, %31 : vector<1x130xi32>
    %33 = arith.andi %30, %32 : vector<1x130xi1>
    %cst_17 = arith.constant 0.000000e+00 : f32
    %34 = vector.broadcast %cst_17 : f32 to vector<128x130xf32>
    %35 = arith.maximumf %24, %34 : vector<128x130xf32>
    %cst_18 = arith.constant 0.000000e+00 : f32
    %36 = vector.shape_cast %33 : vector<1x130xi1> to vector<1x130xi1>
    %37 = vector.broadcast %36 : vector<1x130xi1> to vector<128x130xi1>
    %38 = vector.broadcast %cst_18 : f32 to vector<128x130xf32>
    %39 = arith.select %37, %35, %38 : vector<128x130xi1>, vector<128x130xf32>
    %c0_19 = arith.constant 0 : index
    %c0_20 = arith.constant 0 : index
    %40 = vector.load %arg9[%c0_19, %c0_20] : memref<128x130xf32, #tpu.memory_space<vmem>>, vector<128x130xf32>
    tpu.vector_store %arg9[%c0_19, %c0_20], %39 {strides = array<i32>} : memref<128x130xf32, #tpu.memory_space<vmem>>, vector<128x130xf32>,
    %c0_21 = arith.constant 0 : index
    %c0_22 = arith.constant 0 : index
    %c0_23 = arith.constant 0 : index
    %41 = vector.load %arg5[%c0_21, %c0_22, %c0_23] : memref<3x32x128xf32, #tpu.memory_space<vmem>>, vector<1x32x128xf32>
    %42 = vector.shape_cast %41 : vector<1x32x128xf32> to vector<32x128xf32>
    %c0_24 = arith.constant 0 : index
    %c0_25 = arith.constant 0 : index
    %43 = vector.load %arg9[%c0_24, %c0_25] : memref<128x130xf32, #tpu.memory_space<vmem>>, vector<128x128xf32>
    %cst_26 = arith.constant dense<0.000000e+00> : vector<32x128xf32>
    %44 = tpu.matmul %42, %43, %cst_26 {dimension_numbers = #tpu.dot_dimension_numbers<[1], [0], [0], [1], [0, 0, 1, 1], [], []>} : vector<32x128xf32>, vector<128x128xf32>, vector<32x128xf32> -> vector<32x128xf32>
    %c1_27 = arith.constant 1 : index
    %c0_28 = arith.constant 0 : index
    %c0_29 = arith.constant 0 : index
    %45 = vector.load %arg5[%c1_27, %c0_28, %c0_29] : memref<3x32x128xf32, #tpu.memory_space<vmem>>, vector<1x32x128xf32>
    %46 = vector.shape_cast %45 : vector<1x32x128xf32> to vector<32x128xf32>
    %c0_30 = arith.constant 0 : index
    %c1_31 = arith.constant 1 : index
    %47 = vector.load %arg9[%c0_30, %c1_31] : memref<128x130xf32, #tpu.memory_space<vmem>>, vector<128x128xf32>
    %cst_32 = arith.constant dense<0.000000e+00> : vector<32x128xf32>
    %48 = tpu.matmul %46, %47, %cst_32 {dimension_numbers = #tpu.dot_dimension_numbers<[1], [0], [0], [1], [0, 0, 1, 1], [], []>} : vector<32x128xf32>, vector<128x128xf32>, vector<32x128xf32> -> vector<32x128xf32>
    %49 = arith.addf %44, %48 : vector<32x128xf32>
    %c2_33 = arith.constant 2 : index
    %c0_34 = arith.constant 0 : index
    %c0_35 = arith.constant 0 : index
    %50 = vector.load %arg5[%c2_33, %c0_34, %c0_35] : memref<3x32x128xf32, #tpu.memory_space<vmem>>, vector<1x32x128xf32>
    %51 = vector.shape_cast %50 : vector<1x32x128xf32> to vector<32x128xf32>
    %c0_36 = arith.constant 0 : index
    %c2_37 = arith.constant 2 : index
    %52 = vector.load %arg9[%c0_36, %c2_37] : memref<128x130xf32, #tpu.memory_space<vmem>>, vector<128x128xf32>
    %cst_38 = arith.constant dense<0.000000e+00> : vector<32x128xf32>
    %53 = tpu.matmul %51, %52, %cst_38 {dimension_numbers = #tpu.dot_dimension_numbers<[1], [0], [0], [1], [0, 0, 1, 1], [], []>} : vector<32x128xf32>, vector<128x128xf32>, vector<32x128xf32> -> vector<32x128xf32>
    %54 = arith.addf %49, %53 : vector<32x128xf32>
    %c0_39 = arith.constant 0 : index
    %c0_40 = arith.constant 0 : index
    %55 = vector.load %arg7[%c0_39, %c0_40] : memref<32x1xf32, #tpu.memory_space<vmem>>, vector<32x1xf32>
    %56 = vector.broadcast %55 : vector<32x1xf32> to vector<32x128xf32>
    %57 = arith.addf %54, %56 : vector<32x128xf32>
    %58 = vector.extract_strided_slice %5 {offsets = [0, 2], sizes = [4, 128], strides = [1, 1]} : vector<4x132xf32> to vector<4x128xf32>
    %59 = tpu.concatenate %57, %58 in 0 : vector<32x128xf32>, vector<4x128xf32> -> vector<36x128xf32>
    %c0_41 = arith.constant 0 : index
    %c0_42 = arith.constant 0 : index
    %c0_43 = arith.constant 0 : index
    %60 = vector.load %arg8[%c0_41, %c0_42, %c0_43] : memref<1x36x128xf32, #tpu.memory_space<vmem>>, vector<1x36x128xf32>
    %61 = vector.shape_cast %60 : vector<1x36x128xf32> to vector<36x128xf32>
    %62 = vector.shape_cast %59 : vector<36x128xf32> to vector<1x36x128xf32>
    tpu.vector_store %arg8[%c0_41, %c0_42, %c0_43], %62 {strides = array<i32>} : memref<1x36x128xf32, #tpu.memory_space<vmem>>, vector<1x36x128xf32>,
    return
  }
  func.func @transform_0(%arg0: i32, %arg1: i32) -> (i32, i32, i32) {
    %c0_i32 = arith.constant 0 : i32
    %c0_i32_0 = arith.constant 0 : i32
    return %arg0, %c0_i32, %arg1 : i32, i32, i32
  }
  func.func @transform_1(%arg0: i32, %arg1: i32) -> (i32, i32, i32) {
    %c1_i32 = arith.constant 1 : i32
    %0 = arith.addi %arg1, %c1_i32 : i32
    %c1_i32_0 = arith.constant 1 : i32
    %1 = arith.muli %0, %c1_i32_0 : i32
    %c0_i32 = arith.constant 0 : i32
    %c0_i32_1 = arith.constant 0 : i32
    return %arg0, %c0_i32, %1 : i32, i32, i32
  }
  func.func @transform_2(%arg0: i32, %arg1: i32) -> (i32, i32, i32) {
    %c0_i32 = arith.constant 0 : i32
    %c0_i32_0 = arith.constant 0 : i32
    %c0_i32_1 = arith.constant 0 : i32
    %c0_i32_2 = arith.constant 0 : i32
    return %c0_i32, %c0_i32_0, %c0_i32_1 : i32, i32, i32
  }
  func.func @transform_3(%arg0: i32, %arg1: i32) -> (i32, i32, i32) {
    %c0_i32 = arith.constant 0 : i32
    %c0_i32_0 = arith.constant 0 : i32
    %c0_i32_1 = arith.constant 0 : i32
    %c0_i32_2 = arith.constant 0 : i32
    return %c0_i32, %c0_i32_0, %c0_i32_1 : i32, i32, i32
  }
  func.func @transform_4(%arg0: i32, %arg1: i32) -> (i32, i32) {
    %c0_i32 = arith.constant 0 : i32
    %c0_i32_0 = arith.constant 0 : i32
    %c0_i32_1 = arith.constant 0 : i32
    return %c0_i32, %c0_i32_0 : i32, i32
  }
  func.func @transform_5(%arg0: i32, %arg1: i32) -> (i32, i32) {
    %c0_i32 = arith.constant 0 : i32
    %c0_i32_0 = arith.constant 0 : i32
    %c0_i32_1 = arith.constant 0 : i32
    return %c0_i32, %c0_i32_0 : i32, i32
  }
  func.func @transform_6(%arg0: i32, %arg1: i32) -> (i32, i32, i32) {
    %c0_i32 = arith.constant 0 : i32
    %c0_i32_0 = arith.constant 0 : i32
    return %arg0, %c0_i32, %arg1 : i32, i32, i32
  }
}

</mosaic_0001>

<llo_original>
// kernel: tpu_custom_call.1
$region0: #{tpu_custom_call.1}
  #allocation0 [shape = 'u32[]', space=smem, size = 0x4, offset = 0x4, fixed_abs, tag = 'smem constant byte address 0x4 - core index']
  #allocation1 [shape = 'u32[144,128]{1,0:T(1,128)}', space=vmem, size = 0x12000, scoped, tag = 'internal scratch']
  #allocation2 [shape = 'f32[128,130]{1,0:T(8,128)}', space=vmem, size = 0x20000, scoped, tag = 'scratch operand']
  %s0 = inlined_call_operand.vmem [shape: f32[2,4,256], index: 0, kind: input, shape index: {}]
  %s1 = inlined_call_operand.vmem [shape: f32[2,4,256], index: 1, kind: input, shape index: {}]
  %s2 = inlined_call_operand.vmem [shape: f32[3,128,4], index: 2, kind: input, shape index: {}]
  %s3 = inlined_call_operand.vmem [shape: f32[3,32,128], index: 3, kind: input, shape index: {}]
  %s4 = inlined_call_operand.vmem [shape: f32[128,1], index: 4, kind: input, shape index: {}]
  %s5 = inlined_call_operand.vmem [shape: f32[32,1], index: 5, kind: input, shape index: {}]
  %s6 = inlined_call_operand.vmem [shape: f32[2,36,128], index: 6, kind: output, shape index: {}]
  %s7 = sld [smem:[#allocation0]]
  $region57: #{tpu_custom_call.1} parent=0
    _
  %s9 = ssub.s32 1, %s7
  %s10 = scalar_select 0, %s9, %s7
  loop: start=0, step=1, limit=4
  $region2: #{tpu_custom_call.1} parent=0 // loop_pre_header
    _
  $region3: #{tpu_custom_call.1} parent=0 // loop_header
    %s12 = sphi 0, %s16
    %p13 = scmp.ge.s32.totalorder %s12, 4
    %s19 = sphi 0, %s31
    %s20 = sphi 0, %s27
    %s21 = sphi 0, %s19
    %s22 = sphi 0, %s20
    %s23 = sphi 0, %s21
    %s24 = sphi 0, %s22
    %s36 = sphi 0, %s38
    %s39 = sphi 0, %s36
    %s40 = sphi 0, %s39
    %s56 = sphi 0, %s40
    %s66 = sphi 0, %s68
    %s69 = sphi 0, %s66
    %s70 = sphi 0, %s69
    %s86 = sphi 0, %s70
    %s90 = sphi 0, %s90
    %s92 = sphi 0, %s90
    %s93 = sphi 0, %s92
    %s107 = sphi 0, %s93
    %s111 = sphi 0, %s111
    %s113 = sphi 0, %s111
    %s114 = sphi 0, %s113
    %s128 = sphi 0, %s114
    %s132 = sphi 0, %s132
    %s134 = sphi 0, %s132
    %s135 = sphi 0, %s134
    %s149 = sphi 0, %s135
    %s153 = sphi 0, %s153
    %s155 = sphi 0, %s153
    %s156 = sphi 0, %s155
    %s170 = sphi 0, %s156
    %s178 = sphi 0, %s180
    %s181 = sphi 0, %s178
    %s182 = sphi 0, %s181
    %s198 = sphi 0, %s182
  $region4: #{tpu_custom_call.1} parent=0 // loop_header_branch
    %15 = sbr.rel (%p13) target = $region8
  $region5: #{tpu_custom_call.1} parent=0 // loop_body
    %s17 = ssub.s32 %s12, 1
    %s18 = ssub.s32 %s12, 2
    %s25 = sadd.s32 1, %s20
    %p26 = scmp.ge.s32.totalorder %s25, 1
    %s27 = scalar_select %p26, 0, %s25
    %s28 = sadd.s32 1, %s19
    %s29 = scalar_select %p26, %s28, %s19
    %p30 = scmp.ge.s32.totalorder %s29, 2
    %s31 = scalar_select %p30, 0, %s29
    %s32 = ssub.s32 %s19, %s31
    %s33 = ssub.s32 %s20, %s27
    %s34 = sor.u32 %s32, %s33
    %p35 = scmp.eq.s32.totalorder %s34, 0
    %s37 = sadd.s32 %s36, 1
    %s38 = scalar_select %p35, %s36, %s37
    %p41 = pneg %p35
    %p42 = scmp.eq.s32.totalorder %s12, 1
    %p43 = por %p41, %p42
    %p44 = scmp.ne.s32.totalorder %s36, %s39
    %p45 = scmp.eq.s32.totalorder %s12, 0
    %p46 = por %p44, %p45
    %p47 = scmp.ne.s32.totalorder %s36, %s39
    %p48 = scmp.eq.s32.totalorder %s17, 1
    %p49 = por %p47, %p48
    %p50 = scmp.ne.s32.totalorder %s39, %s40
    %p51 = scmp.eq.s32.totalorder %s17, 0
    %p52 = por %p50, %p51
    %p53 = scmp.ne.s32.totalorder %s39, %s40
    %p54 = scmp.eq.s32.totalorder %s18, 1
    %p55 = por %p53, %p54
    %p57 = scmp.ne.s32.totalorder %s40, %s56
    %p58 = scmp.eq.s32.totalorder %s18, 0
    %p59 = por %p57, %p58
    %s60 = sadd.s32 %s20, 1
    %s61 = sadd.s32 %s27, 1
    %s62 = ssub.s32 %s19, %s31
    %s63 = ssub.s32 %s60, %s61
    %s64 = sor.u32 %s62, %s63
    %p65 = scmp.eq.s32.totalorder %s64, 0
    %s67 = sadd.s32 %s66, 1
    %s68 = scalar_select %p65, %s66, %s67
    %p71 = pneg %p65
    %p72 = scmp.eq.s32.totalorder %s12, 1
    %p73 = por %p71, %p72
    %p74 = scmp.ne.s32.totalorder %s66, %s69
    %p75 = scmp.eq.s32.totalorder %s12, 0
    %p76 = por %p74, %p75
    %p77 = scmp.ne.s32.totalorder %s66, %s69
    %p78 = scmp.eq.s32.totalorder %s17, 1
    %p79 = por %p77, %p78
    %p80 = scmp.ne.s32.totalorder %s69, %s70
    %p81 = scmp.eq.s32.totalorder %s17, 0
    %p82 = por %p80, %p81
    %p83 = scmp.ne.s32.totalorder %s69, %s70
    %p84 = scmp.eq.s32.totalorder %s18, 1
    %p85 = por %p83, %p84
    %p87 = scmp.ne.s32.totalorder %s70, %s86
    %p88 = scmp.eq.s32.totalorder %s18, 0
    %p89 = por %p87, %p88
    %s91 = sadd.s32 %s90, 1
    %p94 = scmp.eq.s32.totalorder %s12, 1
    %p95 = scmp.ne.s32.totalorder %s90, %s92
    %p96 = scmp.eq.s32.totalorder %s12, 0
    %p97 = por %p95, %p96
    %p98 = scmp.ne.s32.totalorder %s90, %s92
    %p99 = scmp.eq.s32.totalorder %s17, 1
    %p100 = por %p98, %p99
    %p101 = scmp.ne.s32.totalorder %s92, %s93
    %p102 = scmp.eq.s32.totalorder %s17, 0
    %p103 = por %p101, %p102
    %p104 = scmp.ne.s32.totalorder %s92, %s93
    %p105 = scmp.eq.s32.totalorder %s18, 1
    %p106 = por %p104, %p105
    %p108 = scmp.ne.s32.totalorder %s93, %s107
    %p109 = scmp.eq.s32.totalorder %s18, 0
    %p110 = por %p108, %p109
    %s112 = sadd.s32 %s111, 1
    %p115 = scmp.eq.s32.totalorder %s12, 1
    %p116 = scmp.ne.s32.totalorder %s111, %s113
    %p117 = scmp.eq.s32.totalorder %s12, 0
    %p118 = por %p116, %p117
    %p119 = scmp.ne.s32.totalorder %s111, %s113
    %p120 = scmp.eq.s32.totalorder %s17, 1
    %p121 = por %p119, %p120
    %p122 = scmp.ne.s32.totalorder %s113, %s114
    %p123 = scmp.eq.s32.totalorder %s17, 0
    %p124 = por %p122, %p123
    %p125 = scmp.ne.s32.totalorder %s113, %s114
    %p126 = scmp.eq.s32.totalorder %s18, 1
    %p127 = por %p125, %p126
    %p129 = scmp.ne.s32.totalorder %s114, %s128
    %p130 = scmp.eq.s32.totalorder %s18, 0
    %p131 = por %p129, %p130
    %s133 = sadd.s32 %s132, 1
    %p136 = scmp.eq.s32.totalorder %s12, 1
    %p137 = scmp.ne.s32.totalorder %s132, %s134
    %p138 = scmp.eq.s32.totalorder %s12, 0
    %p139 = por %p137, %p138
    %p140 = scmp.ne.s32.totalorder %s132, %s134
    %p141 = scmp.eq.s32.totalorder %s17, 1
    %p142 = por %p140, %p141
    %p143 = scmp.ne.s32.totalorder %s134, %s135
    %p144 = scmp.eq.s32.totalorder %s17, 0
    %p145 = por %p143, %p144
    %p146 = scmp.ne.s32.totalorder %s134, %s135
    %p147 = scmp.eq.s32.totalorder %s18, 1
    %p148 = por %p146, %p147
    %p150 = scmp.ne.s32.totalorder %s135, %s149
    %p151 = scmp.eq.s32.totalorder %s18, 0
    %p152 = por %p150, %p151
    %s154 = sadd.s32 %s153, 1
    %p157 = scmp.eq.s32.totalorder %s12, 1
    %p158 = scmp.ne.s32.totalorder %s153, %s155
    %p159 = scmp.eq.s32.totalorder %s12, 0
    %p160 = por %p158, %p159
    %p161 = scmp.ne.s32.totalorder %s153, %s155
    %p162 = scmp.eq.s32.totalorder %s17, 1
    %p163 = por %p161, %p162
    %p164 = scmp.ne.s32.totalorder %s155, %s156
    %p165 = scmp.eq.s32.totalorder %s17, 0
    %p166 = por %p164, %p165
    %p167 = scmp.ne.s32.totalorder %s155, %s156
    %p168 = scmp.eq.s32.totalorder %s18, 1
    %p169 = por %p167, %p168
    %p171 = scmp.ne.s32.totalorder %s156, %s170
    %p172 = scmp.eq.s32.totalorder %s18, 0
    %p173 = por %p171, %p172
    %s174 = ssub.s32 %s19, %s31
    %s175 = ssub.s32 %s20, %s27
    %s176 = sor.u32 %s174, %s175
    %p177 = scmp.eq.s32.totalorder %s176, 0
    %s179 = sadd.s32 %s178, 1
    %s180 = scalar_select %p177, %s178, %s179
    %p183 = pneg %p177
    %p184 = scmp.eq.s32.totalorder %s12, 1
    %p185 = por %p183, %p184
    %p186 = scmp.ne.s32.totalorder %s178, %s181
    %p187 = scmp.eq.s32.totalorder %s12, 0
    %p188 = por %p186, %p187
    %p189 = scmp.ne.s32.totalorder %s178, %s181
    %p190 = scmp.eq.s32.totalorder %s17, 1
    %p191 = por %p189, %p190
    %p192 = scmp.ne.s32.totalorder %s181, %s182
    %p193 = scmp.eq.s32.totalorder %s17, 0
    %p194 = por %p192, %p193
    %p195 = scmp.ne.s32.totalorder %s181, %s182
    %p196 = scmp.eq.s32.totalorder %s18, 1
    %p197 = por %p195, %p196
    %p199 = scmp.ne.s32.totalorder %s182, %s198
    %p200 = scmp.eq.s32.totalorder %s18, 0
    %p201 = por %p199, %p200
    %p202 = scmp.le.s32.totalorder 1, %s12
    %p203 = scmp.lt.s32.totalorder %s12, 3
    %p204 = pnand %p202, %p203
    %p205 = pneg %p204
    // Predicated region
    $region9: #{tpu_custom_call.1} parent=5 // pred_check
      _
    $region10: #{tpu_custom_call.1} parent=5 // pred_check_branch
      %207 = sbr.rel (%p204) target = $region12
    $region11: #{tpu_custom_call.1} parent=5 // pred_region
      %s208 = ssub.s32 %s12, 1
      // Predicated region
      $region13: #{tpu_custom_call.1} parent=11 // pred_check
        %p209 = pneg %p103
      $region14: #{tpu_custom_call.1} parent=11 // pred_check_branch
        %211 = sbr.rel (%p209) target = $region16
      $region15: #{tpu_custom_call.1} parent=11 // pred_region
        _
      $region16: #{tpu_custom_call.1} parent=11 // pred_fallthru
        _
      // Predicated region
      $region17: #{tpu_custom_call.1} parent=11 // pred_check
        %p212 = pneg %p124
      $region18: #{tpu_custom_call.1} parent=11 // pred_check_branch
        %214 = sbr.rel (%p212) target = $region20
      $region19: #{tpu_custom_call.1} parent=11 // pred_region
        _
      $region20: #{tpu_custom_call.1} parent=11 // pred_fallthru
        _
      // Predicated region
      $region21: #{tpu_custom_call.1} parent=11 // pred_check
        %p215 = pneg %p145
      $region22: #{tpu_custom_call.1} parent=11 // pred_check_branch
        %217 = sbr.rel (%p215) target = $region24
      $region23: #{tpu_custom_call.1} parent=11 // pred_region
        _
      $region24: #{tpu_custom_call.1} parent=11 // pred_fallthru
        _
      // Predicated region
      $region25: #{tpu_custom_call.1} parent=11 // pred_check
        %p218 = pneg %p166
      $region26: #{tpu_custom_call.1} parent=11 // pred_check_branch
        %220 = sbr.rel (%p218) target = $region28
      $region27: #{tpu_custom_call.1} parent=11 // pred_region
        _
      $region28: #{tpu_custom_call.1} parent=11 // pred_fallthru
        _
    $region12: #{tpu_custom_call.1} parent=5 // pred_fallthru
      _
    %p221 = scmp.lt.s32.totalorder %s12, 2
    // Predicated region
    $region29: #{tpu_custom_call.1} parent=5 // pred_check
      %p222 = pneg %p221
    $region30: #{tpu_custom_call.1} parent=5 // pred_check_branch
      %224 = sbr.rel (%p222) target = $region32
    $region31: #{tpu_custom_call.1} parent=5 // pred_region
      // Predicated region
      $region33: #{tpu_custom_call.1} parent=31 // pred_check
        %p225 = pneg %p46
      $region34: #{tpu_custom_call.1} parent=31 // pred_check_branch
        %227 = sbr.rel (%p225) target = $region36
      $region35: #{tpu_custom_call.1} parent=31 // pred_region
        %p228 = scmp.lt.s32.totalorder %s19, 1
        %s229 = scalar_select %p228, %s19, 1
        %p230 = scmp.lt.s32.totalorder %s20, 1
        %s231 = scalar_select %p230, %s20, 1
        %s232 = smul.addr %s229, 2
        %s233 = sadd.s32 %s231, %s232
        %s234 = smul.addr %s233, 4
        %s235 = scalar_lea.vmem %s0, %s234
      $region36: #{tpu_custom_call.1} parent=31 // pred_fallthru
        _
      // Predicated region
      $region37: #{tpu_custom_call.1} parent=31 // pred_check
        %p236 = pneg %p76
      $region38: #{tpu_custom_call.1} parent=31 // pred_check_branch
        %238 = sbr.rel (%p236) target = $region40
      $region39: #{tpu_custom_call.1} parent=31 // pred_region
        %s239 = sadd.s32 %s20, 1
        %p240 = scmp.lt.s32.totalorder %s19, 1
        %s241 = scalar_select %p240, %s19, 1
        %p242 = scmp.lt.s32.totalorder %s239, 1
        %s243 = scalar_select %p242, %s239, 1
        %s244 = smul.addr %s241, 2
        %s245 = sadd.s32 %s243, %s244
        %s246 = smul.addr %s245, 4
        %s247 = scalar_lea.vmem %s1, %s246
        %s248 = sadd.s32 %s20, 1
      $region40: #{tpu_custom_call.1} parent=31 // pred_fallthru
        _
    $region32: #{tpu_custom_call.1} parent=5 // pred_fallthru
      _
    %p249 = scmp.le.s32.totalorder 1, %s12
    %p250 = scmp.lt.s32.totalorder %s12, 3
    %p251 = pnand %p249, %p250
    %p252 = pneg %p251
    // Predicated region
    $region41: #{tpu_custom_call.1} parent=5 // pred_check
      _
    $region42: #{tpu_custom_call.1} parent=5 // pred_check_branch
      %254 = sbr.rel (%p251) target = $region44
    $region43: #{tpu_custom_call.1} parent=5 // pred_region
      %s255 = ssub.s32 %s12, 1
      %p256 = scmp.lt.s32.totalorder %s21, 1
      %s257 = scalar_select %p256, %s21, 1
      %p258 = scmp.lt.s32.totalorder %s22, 1
      %s259 = scalar_select %p258, %s22, 1
      %s260 = smul.addr %s257, 2
      %s261 = sadd.s32 %s259, %s260
      %s262 = smul.addr %s261, 4
      %s263 = scalar_lea.vmem %s0, %s262
      %p264 = pneg %p52
      %p265 = pneg %p49
      %s266 = sadd.s32 %s22, 1
      %p267 = scmp.lt.s32.totalorder %s21, 1
      %s268 = scalar_select %p267, %s21, 1
      %p269 = scmp.lt.s32.totalorder %s266, 1
      %s270 = scalar_select %p269, %s266, 1
      %s271 = smul.addr %s268, 2
      %s272 = sadd.s32 %s270, %s271
      %s273 = smul.addr %s272, 4
      %s274 = scalar_lea.vmem %s1, %s273
      %p275 = pneg %p82
      %p276 = pneg %p79
      %p277 = pneg %p103
      %p278 = pneg %p100
      %p279 = pneg %p124
      %p280 = pneg %p121
      %p281 = pneg %p145
      %p282 = pneg %p142
      %p283 = pneg %p166
      %p284 = pneg %p163
      %p285 = pneg %p194
      %p286 = pneg %p191
      %p287 = scmp.lt.s32.totalorder %s21, 1
      %s288 = scalar_select %p287, %s21, 1
      %p289 = scmp.lt.s32.totalorder %s22, 0
      %s290 = scalar_select %p289, %s22, 0
      %s291 = smul.addr %s288, 5
      %s292 = sadd.s32 %s290, %s291
      %s293 = smul.addr %s292, 8
      %s294 = scalar_lea.vmem %s6, %s293
      %p295 = scmp.lt.s32.totalorder %s21, 1
      %s296 = scalar_select %p295, %s21, 1
      %p297 = scmp.lt.s32.totalorder %s22, 1
      %s298 = scalar_select %p297, %s22, 1
      %s299 = smul.addr %s296, 2
      %s300 = sadd.s32 %s298, %s299
      %s301 = smul.addr %s300, 4
      %s302 = scalar_lea.vmem %s0, %s301
      %s303 = sadd.s32 %s22, 1
      %p304 = scmp.lt.s32.totalorder %s21, 1
      %s305 = scalar_select %p304, %s21, 1
      %p306 = scmp.lt.s32.totalorder %s303, 1
      %s307 = scalar_select %p306, %s303, 1
      %s308 = smul.addr %s305, 2
      %s309 = sadd.s32 %s307, %s308
      %s310 = smul.addr %s309, 4
      %s311 = scalar_lea.vmem %s1, %s310
      %s312 = sadd.s32 %s22, 1
      %p313 = scmp.lt.s32.totalorder %s21, 1
      %s314 = scalar_select %p313, %s21, 1
      %p315 = scmp.lt.s32.totalorder %s22, 0
      %s316 = scalar_select %p315, %s22, 0
      %s317 = smul.addr %s314, 5
      %s318 = sadd.s32 %s316, %s317
      %s319 = smul.addr %s318, 8
      %s320 = scalar_lea.vmem %s6, %s319
      %s321 = smul.u32 %s22, 128
      %v322 = vld [vmem:[%s302] sm:$0xf]
      %v323 = vld [vmem:[%s311] sm:$0xf]
      %v324 = vmax.f32 %v322, 0.0
      %v325 = vmax.f32 %v323, 0.0
      %v326 = vld [vmem:[%s2] sm:$0xff]
      %v327 = vld [vmem:[%s2 + $0x8] sm:$0xff]
      %v328 = vld [vmem:[%s2 + $0x10] sm:$0xff]
      %v329 = vld [vmem:[%s2 + $0x18] sm:$0xff]
      %v330 = vld [vmem:[%s2 + $0x20] sm:$0xff]
      %v331 = vld [vmem:[%s2 + $0x28] sm:$0xff]
      %v332 = vld [vmem:[%s2 + $0x30] sm:$0xff]
      %v333 = vld [vmem:[%s2 + $0x38] sm:$0xff]
      %v334 = vld [vmem:[%s2 + $0x40] sm:$0xff]
      %v335 = vld [vmem:[%s2 + $0x48] sm:$0xff]
      %v336 = vld [vmem:[%s2 + $0x50] sm:$0xff]
      %v337 = vld [vmem:[%s2 + $0x58] sm:$0xff]
      %v338 = vld [vmem:[%s2 + $0x60] sm:$0xff]
      %v339 = vld [vmem:[%s2 + $0x68] sm:$0xff]
      %v340 = vld [vmem:[%s2 + $0x70] sm:$0xff]
      %v341 = vld [vmem:[%s2 + $0x78] sm:$0xff]
      %s342 = scalar_lea.vmem %s2, 128
      %v343 = vld [vmem:[%s342] sm:$0xff]
      %v344 = vld [vmem:[%s342 + $0x8] sm:$0xff]
      %v345 = vld [vmem:[%s342 + $0x10] sm:$0xff]
      %v346 = vld [vmem:[%s342 + $0x18] sm:$0xff]
      %v347 = vld [vmem:[%s342 + $0x20] sm:$0xff]
      %v348 = vld [vmem:[%s342 + $0x28] sm:$0xff]
      %v349 = vld [vmem:[%s342 + $0x30] sm:$0xff]
      %v350 = vld [vmem:[%s342 + $0x38] sm:$0xff]
      %v351 = vld [vmem:[%s342 + $0x40] sm:$0xff]
      %v352 = vld [vmem:[%s342 + $0x48] sm:$0xff]
      %v353 = vld [vmem:[%s342 + $0x50] sm:$0xff]
      %v354 = vld [vmem:[%s342 + $0x58] sm:$0xff]
      %v355 = vld [vmem:[%s342 + $0x60] sm:$0xff]
      %v356 = vld [vmem:[%s342 + $0x68] sm:$0xff]
      %v357 = vld [vmem:[%s342 + $0x70] sm:$0xff]
      %v358 = vld [vmem:[%s342 + $0x78] sm:$0xff]
      %361 = vrot.lane.b32.xlu0 %v324, 127
      %v362 = vpop.permute.xlu0 %361
      %363 = vrot.lane.b32.xlu0 %v325, 127
      %v364 = vpop.permute.xlu0 %363
      %vm365 = vcmask 1039360
      %v366 = vsel %vm365, %v362, %v364
      %vm367 = vcmask 31744
      %v369 = vsel %vm367, %v343, 0
      %v372 = vsel %vm367, %v344, 0
      %v375 = vsel %vm367, %v345, 0
      %v378 = vsel %vm367, %v346, 0
      %v381 = vsel %vm367, %v347, 0
      %v384 = vsel %vm367, %v348, 0
      %v387 = vsel %vm367, %v349, 0
      %v390 = vsel %vm367, %v350, 0
      %v393 = vsel %vm367, %v351, 0
      %v396 = vsel %vm367, %v352, 0
      %v399 = vsel %vm367, %v353, 0
      %v402 = vsel %vm367, %v354, 0
      %v405 = vsel %vm367, %v355, 0
      %v408 = vsel %vm367, %v356, 0
      %v411 = vsel %vm367, %v357, 0
      %v414 = vsel %vm367, %v358, 0
      %vm416 = vcmask 1043456
      %v417 = vsel %vm416, %v366, 0
      %v419 = vsel %vm416, %v364, 0
      %421 = vmatprep.subr.mxu0 0.0
      %422 = vmatpush1.msra.mxu0 0.0
      %423 = vmatprep.subr.mxu0 0.0
      %424 = vmatpush1.msra.mxu0 0.0
      %425 = vmatprep.subr.mxu0 0.0
      %426 = vmatpush1.msra.mxu0 0.0
      %427 = vmatprep.subr.mxu0 0.0
      %428 = vmatpush1.msra.mxu0 0.0
      %429 = vmatprep.subr.mxu0 0.0
      %430 = vmatpush1.msra.mxu0 0.0
      %431 = vmatprep.subr.mxu0 0.0
      %432 = vmatpush1.msra.mxu0 0.0
      %433 = vmatprep.subr.mxu0 0.0
      %434 = vmatpush1.msra.mxu0 0.0
      %435 = vmatprep.subr.mxu0 0.0
      %436 = vmatpush1.msra.mxu0 0.0
      %437 = vmatprep.subr.mxu0 0.0
      %438 = vmatpush1.msra.mxu0 0.0
      %439 = vmatprep.subr.mxu0 0.0
      %440 = vmatpush1.msra.mxu0 0.0
      %441 = vmatprep.subr.mxu0 0.0
      %442 = vmatpush1.msra.mxu0 0.0
      %443 = vmatprep.subr.mxu0 0.0
      %444 = vmatpush1.msra.mxu0 0.0
      %445 = vmatprep.subr.mxu0 0.0
      %446 = vmatpush1.msra.mxu0 0.0
      %447 = vmatprep.subr.mxu0 0.0
      %448 = vmatpush1.msra.mxu0 0.0
      %449 = vmatprep.subr.mxu0 0.0
      %450 = vmatpush1.msra.mxu0 0.0
      %451 = vmatprep.subr.mxu0 %v419
      %452 = vmatpush1.msra.mxu0 %v417
      %453 = vmatprep.subr.mxu0 0.0
      %454 = vmatpush2.msra.mxu0 0.0
      %455 = vmatprep.subr.mxu0 0.0
      %456 = vmatpush2.msra.mxu0 0.0
      %457 = vmatprep.subr.mxu0 0.0
      %458 = vmatpush2.msra.mxu0 0.0
      %459 = vmatprep.subr.mxu0 0.0
      %460 = vmatpush2.msra.mxu0 0.0
      %461 = vmatprep.subr.mxu0 0.0
      %462 = vmatpush2.msra.mxu0 0.0
      %463 = vmatprep.subr.mxu0 0.0
      %464 = vmatpush2.msra.mxu0 0.0
      %465 = vmatprep.subr.mxu0 0.0
      %466 = vmatpush2.msra.mxu0 0.0
      %467 = vmatprep.subr.mxu0 0.0
      %468 = vmatpush2.msra.mxu0 0.0
      %469 = vmatprep.subr.mxu0 0.0
      %470 = vmatpush2.msra.mxu0 0.0
      %471 = vmatprep.subr.mxu0 0.0
      %472 = vmatpush2.msra.mxu0 0.0
      %473 = vmatprep.subr.mxu0 0.0
      %474 = vmatpush2.msra.mxu0 0.0
      %475 = vmatprep.subr.mxu0 0.0
      %476 = vmatpush2.msra.mxu0 0.0
      %477 = vmatprep.subr.mxu0 0.0
      %478 = vmatpush2.msra.mxu0 0.0
      %479 = vmatprep.subr.mxu0 0.0
      %480 = vmatpush2.msra.mxu0 0.0
      %481 = vmatprep.subr.mxu0 0.0
      %482 = vmatpush2.msra.mxu0 0.0
      %483 = vmatprep.subr.mxu0 0.0
      %484 = vmatpush2.msra.mxu0 0.0
      %485 = vmatprep.mubr.f32.mxu0 0.0
      %486 = vmatmul.mubr.f32.gmra.mxu0 %v369
      %v487 = vpop.f32.mrf.mxu0
      %v488 = vadd.f32 0.0, %v487
      %v489 = vpop.f32.mrf.mxu0
      %v490 = vadd.f32 0.0, %v489
      %491 = vmatprep.mubr.f32.mxu0 0.0
      %492 = vmatmul.mubr.f32.gmra.mxu0 %v372
      %v493 = vpop.f32.mrf.mxu0
      %v494 = vadd.f32 0.0, %v493
      %v495 = vpop.f32.mrf.mxu0
      %v496 = vadd.f32 0.0, %v495
      %497 = vmatprep.mubr.f32.mxu0 0.0
      %498 = vmatmul.mubr.f32.gmra.mxu0 %v375
      %v499 = vpop.f32.mrf.mxu0
      %v500 = vadd.f32 0.0, %v499
      %v501 = vpop.f32.mrf.mxu0
      %v502 = vadd.f32 0.0, %v501
      %503 = vmatprep.mubr.f32.mxu0 0.0
      %504 = vmatmul.mubr.f32.gmra.mxu0 %v378
      %v505 = vpop.f32.mrf.mxu0
      %v506 = vadd.f32 0.0, %v505
      %v507 = vpop.f32.mrf.mxu0
      %v508 = vadd.f32 0.0, %v507
      %509 = vmatprep.mubr.f32.mxu0 0.0
      %510 = vmatmul.mubr.f32.gmra.mxu0 %v381
      %v511 = vpop.f32.mrf.mxu0
      %v512 = vadd.f32 0.0, %v511
      %v513 = vpop.f32.mrf.mxu0
      %v514 = vadd.f32 0.0, %v513
      %515 = vmatprep.mubr.f32.mxu0 0.0
      %516 = vmatmul.mubr.f32.gmra.mxu0 %v384
      %v517 = vpop.f32.mrf.mxu0
      %v518 = vadd.f32 0.0, %v517
      %v519 = vpop.f32.mrf.mxu0
      %v520 = vadd.f32 0.0, %v519
      %521 = vmatprep.mubr.f32.mxu0 0.0
      %522 = vmatmul.mubr.f32.gmra.mxu0 %v387
      %v523 = vpop.f32.mrf.mxu0
      %v524 = vadd.f32 0.0, %v523
      %v525 = vpop.f32.mrf.mxu0
      %v526 = vadd.f32 0.0, %v525
      %527 = vmatprep.mubr.f32.mxu0 0.0
      %528 = vmatmul.mubr.f32.gmra.mxu0 %v390
      %v529 = vpop.f32.mrf.mxu0
      %v530 = vadd.f32 0.0, %v529
      %v531 = vpop.f32.mrf.mxu0
      %v532 = vadd.f32 0.0, %v531
      %533 = vmatprep.mubr.f32.mxu0 0.0
      %534 = vmatmul.mubr.f32.gmra.mxu0 %v393
      %v535 = vpop.f32.mrf.mxu0
      %v536 = vadd.f32 0.0, %v535
      %v537 = vpop.f32.mrf.mxu0
      %v538 = vadd.f32 0.0, %v537
      %539 = vmatprep.mubr.f32.mxu0 0.0
      %540 = vmatmul.mubr.f32.gmra.mxu0 %v396
      %v541 = vpop.f32.mrf.mxu0
      %v542 = vadd.f32 0.0, %v541
      %v543 = vpop.f32.mrf.mxu0
      %v544 = vadd.f32 0.0, %v543
      %545 = vmatprep.mubr.f32.mxu0 0.0
      %546 = vmatmul.mubr.f32.gmra.mxu0 %v399
      %v547 = vpop.f32.mrf.mxu0
      %v548 = vadd.f32 0.0, %v547
      %v549 = vpop.f32.mrf.mxu0
      %v550 = vadd.f32 0.0, %v549
      %551 = vmatprep.mubr.f32.mxu0 0.0
      %552 = vmatmul.mubr.f32.gmra.mxu0 %v402
      %v553 = vpop.f32.mrf.mxu0
      %v554 = vadd.f32 0.0, %v553
      %v555 = vpop.f32.mrf.mxu0
      %v556 = vadd.f32 0.0, %v555
      %557 = vmatprep.mubr.f32.mxu0 0.0
      %558 = vmatmul.mubr.f32.gmra.mxu0 %v405
      %v559 = vpop.f32.mrf.mxu0
      %v560 = vadd.f32 0.0, %v559
      %v561 = vpop.f32.mrf.mxu0
      %v562 = vadd.f32 0.0, %v561
      %563 = vmatprep.mubr.f32.mxu0 0.0
      %564 = vmatmul.mubr.f32.gmra.mxu0 %v408
      %v565 = vpop.f32.mrf.mxu0
      %v566 = vadd.f32 0.0, %v565
      %v567 = vpop.f32.mrf.mxu0
      %v568 = vadd.f32 0.0, %v567
      %569 = vmatprep.mubr.f32.mxu0 0.0
      %570 = vmatmul.mubr.f32.gmra.mxu0 %v411
      %v571 = vpop.f32.mrf.mxu0
      %v572 = vadd.f32 0.0, %v571
      %v573 = vpop.f32.mrf.mxu0
      %v574 = vadd.f32 0.0, %v573
      %575 = vmatprep.mubr.f32.mxu0 0.0
      %576 = vmatmul.mubr.f32.gmra.mxu0 %v414
      %v577 = vpop.f32.mrf.mxu0
      %v578 = vadd.f32 0.0, %v577
      %v579 = vpop.f32.mrf.mxu0
      %v580 = vadd.f32 0.0, %v579
      %581 = vdwg.mxu0
      %v583 = vsel %vm367, %v326, 0
      %v586 = vsel %vm367, %v327, 0
      %v589 = vsel %vm367, %v328, 0
      %v592 = vsel %vm367, %v329, 0
      %v595 = vsel %vm367, %v330, 0
      %v598 = vsel %vm367, %v331, 0
      %v601 = vsel %vm367, %v332, 0
      %v604 = vsel %vm367, %v333, 0
      %v607 = vsel %vm367, %v334, 0
      %v610 = vsel %vm367, %v335, 0
      %v613 = vsel %vm367, %v336, 0
      %v616 = vsel %vm367, %v337, 0
      %v619 = vsel %vm367, %v338, 0
      %v622 = vsel %vm367, %v339, 0
      %v625 = vsel %vm367, %v340, 0
      %v628 = vsel %vm367, %v341, 0
      %v630 = vsel %vm416, %v324, 0
      %v632 = vsel %vm416, %v325, 0
      %634 = vmatprep.subr.mxu0 0.0
      %635 = vmatpush1.msra.mxu0 0.0
      %636 = vmatprep.subr.mxu0 0.0
      %637 = vmatpush1.msra.mxu0 0.0
      %638 = vmatprep.subr.mxu0 0.0
      %639 = vmatpush1.msra.mxu0 0.0
      %640 = vmatprep.subr.mxu0 0.0
      %641 = vmatpush1.msra.mxu0 0.0
      %642 = vmatprep.subr.mxu0 0.0
      %643 = vmatpush1.msra.mxu0 0.0
      %644 = vmatprep.subr.mxu0 0.0
      %645 = vmatpush1.msra.mxu0 0.0
      %646 = vmatprep.subr.mxu0 0.0
      %647 = vmatpush1.msra.mxu0 0.0
      %648 = vmatprep.subr.mxu0 0.0
      %649 = vmatpush1.msra.mxu0 0.0
      %650 = vmatprep.subr.mxu0 0.0
      %651 = vmatpush1.msra.mxu0 0.0
      %652 = vmatprep.subr.mxu0 0.0
      %653 = vmatpush1.msra.mxu0 0.0
      %654 = vmatprep.subr.mxu0 0.0
      %655 = vmatpush1.msra.mxu0 0.0
      %656 = vmatprep.subr.mxu0 0.0
      %657 = vmatpush1.msra.mxu0 0.0
      %658 = vmatprep.subr.mxu0 0.0
      %659 = vmatpush1.msra.mxu0 0.0
      %660 = vmatprep.subr.mxu0 0.0
      %661 = vmatpush1.msra.mxu0 0.0
      %662 = vmatprep.subr.mxu0 0.0
      %663 = vmatpush1.msra.mxu0 0.0
      %664 = vmatprep.subr.mxu0 %v632
      %665 = vmatpush1.msra.mxu0 %v630
      %666 = vmatprep.subr.mxu0 0.0
      %667 = vmatpush2.msra.mxu0 0.0
      %668 = vmatprep.subr.mxu0 0.0
      %669 = vmatpush2.msra.mxu0 0.0
      %670 = vmatprep.subr.mxu0 0.0
      %671 = vmatpush2.msra.mxu0 0.0
      %672 = vmatprep.subr.mxu0 0.0
      %673 = vmatpush2.msra.mxu0 0.0
      %674 = vmatprep.subr.mxu0 0.0
      %675 = vmatpush2.msra.mxu0 0.0
      %676 = vmatprep.subr.mxu0 0.0
      %677 = vmatpush2.msra.mxu0 0.0
      %678 = vmatprep.subr.mxu0 0.0
      %679 = vmatpush2.msra.mxu0 0.0
      %680 = vmatprep.subr.mxu0 0.0
      %681 = vmatpush2.msra.mxu0 0.0
      %682 = vmatprep.subr.mxu0 0.0
      %683 = vmatpush2.msra.mxu0 0.0
      %684 = vmatprep.subr.mxu0 0.0
      %685 = vmatpush2.msra.mxu0 0.0
      %686 = vmatprep.subr.mxu0 0.0
      %687 = vmatpush2.msra.mxu0 0.0
      %688 = vmatprep.subr.mxu0 0.0
      %689 = vmatpush2.msra.mxu0 0.0
      %690 = vmatprep.subr.mxu0 0.0
      %691 = vmatpush2.msra.mxu0 0.0
      %692 = vmatprep.subr.mxu0 0.0
      %693 = vmatpush2.msra.mxu0 0.0
      %694 = vmatprep.subr.mxu0 0.0
      %695 = vmatpush2.msra.mxu0 0.0
      %696 = vmatprep.subr.mxu0 0.0
      %697 = vmatpush2.msra.mxu0 0.0
      %698 = vmatprep.mubr.f32.mxu0 0.0
      %699 = vmatmul.mubr.f32.gmra.mxu0 %v583
      %v700 = vpop.f32.mrf.mxu0
      %v701 = vadd.f32 %v488, %v700
      %v702 = vpop.f32.mrf.mxu0
      %v703 = vadd.f32 %v490, %v702
      %704 = vmatprep.mubr.f32.mxu0 0.0
      %705 = vmatmul.mubr.f32.gmra.mxu0 %v586
      %v706 = vpop.f32.mrf.mxu0
      %v707 = vadd.f32 %v494, %v706
      %v708 = vpop.f32.mrf.mxu0
      %v709 = vadd.f32 %v496, %v708
      %710 = vmatprep.mubr.f32.mxu0 0.0
      %711 = vmatmul.mubr.f32.gmra.mxu0 %v589
      %v712 = vpop.f32.mrf.mxu0
      %v713 = vadd.f32 %v500, %v712
      %v714 = vpop.f32.mrf.mxu0
      %v715 = vadd.f32 %v502, %v714
      %716 = vmatprep.mubr.f32.mxu0 0.0
      %717 = vmatmul.mubr.f32.gmra.mxu0 %v592
      %v718 = vpop.f32.mrf.mxu0
      %v719 = vadd.f32 %v506, %v718
      %v720 = vpop.f32.mrf.mxu0
      %v721 = vadd.f32 %v508, %v720
      %722 = vmatprep.mubr.f32.mxu0 0.0
      %723 = vmatmul.mubr.f32.gmra.mxu0 %v595
      %v724 = vpop.f32.mrf.mxu0
      %v725 = vadd.f32 %v512, %v724
      %v726 = vpop.f32.mrf.mxu0
      %v727 = vadd.f32 %v514, %v726
      %728 = vmatprep.mubr.f32.mxu0 0.0
      %729 = vmatmul.mubr.f32.gmra.mxu0 %v598
      %v730 = vpop.f32.mrf.mxu0
      %v731 = vadd.f32 %v518, %v730
      %v732 = vpop.f32.mrf.mxu0
      %v733 = vadd.f32 %v520, %v732
      %734 = vmatprep.mubr.f32.mxu0 0.0
      %735 = vmatmul.mubr.f32.gmra.mxu0 %v601
      %v736 = vpop.f32.mrf.mxu0
      %v737 = vadd.f32 %v524, %v736
      %v738 = vpop.f32.mrf.mxu0
      %v739 = vadd.f32 %v526, %v738
      %740 = vmatprep.mubr.f32.mxu0 0.0
      %741 = vmatmul.mubr.f32.gmra.mxu0 %v604
      %v742 = vpop.f32.mrf.mxu0
      %v743 = vadd.f32 %v530, %v742
      %v744 = vpop.f32.mrf.mxu0
      %v745 = vadd.f32 %v532, %v744
      %746 = vmatprep.mubr.f32.mxu0 0.0
      %747 = vmatmul.mubr.f32.gmra.mxu0 %v607
      %v748 = vpop.f32.mrf.mxu0
      %v749 = vadd.f32 %v536, %v748
      %v750 = vpop.f32.mrf.mxu0
      %v751 = vadd.f32 %v538, %v750
      %752 = vmatprep.mubr.f32.mxu0 0.0
      %753 = vmatmul.mubr.f32.gmra.mxu0 %v610
      %v754 = vpop.f32.mrf.mxu0
      %v755 = vadd.f32 %v542, %v754
      %v756 = vpop.f32.mrf.mxu0
      %v757 = vadd.f32 %v544, %v756
      %758 = vmatprep.mubr.f32.mxu0 0.0
      %759 = vmatmul.mubr.f32.gmra.mxu0 %v613
      %v760 = vpop.f32.mrf.mxu0
      %v761 = vadd.f32 %v548, %v760
      %v762 = vpop.f32.mrf.mxu0
      %v763 = vadd.f32 %v550, %v762
      %764 = vmatprep.mubr.f32.mxu0 0.0
      %765 = vmatmul.mubr.f32.gmra.mxu0 %v616
      %v766 = vpop.f32.mrf.mxu0
      %v767 = vadd.f32 %v554, %v766
      %v768 = vpop.f32.mrf.mxu0
      %v769 = vadd.f32 %v556, %v768
      %770 = vmatprep.mubr.f32.mxu0 0.0
      %771 = vmatmul.mubr.f32.gmra.mxu0 %v619
      %v772 = vpop.f32.mrf.mxu0
      %v773 = vadd.f32 %v560, %v772
      %v774 = vpop.f32.mrf.mxu0
      %v775 = vadd.f32 %v562, %v774
      %776 = vmatprep.mubr.f32.mxu0 0.0
      %777 = vmatmul.mubr.f32.gmra.mxu0 %v622
      %v778 = vpop.f32.mrf.mxu0
      %v779 = vadd.f32 %v566, %v778
      %v780 = vpop.f32.mrf.mxu0
      %v781 = vadd.f32 %v568, %v780
      %782 = vmatprep.mubr.f32.mxu0 0.0
      %783 = vmatmul.mubr.f32.gmra.mxu0 %v625
      %v784 = vpop.f32.mrf.mxu0
      %v785 = vadd.f32 %v572, %v784
      %v786 = vpop.f32.mrf.mxu0
      %v787 = vadd.f32 %v574, %v786
      %788 = vmatprep.mubr.f32.mxu0 0.0
      %789 = vmatmul.mubr.f32.gmra.mxu0 %v628
      %v790 = vpop.f32.mrf.mxu0
      %v791 = vadd.f32 %v578, %v790
      %v792 = vpop.f32.mrf.mxu0
      %v793 = vadd.f32 %v580, %v792
      %794 = vdwg.mxu0
      %s795 = scalar_lea.vmem %s2, 256
      %v796 = vld [vmem:[%s795] sm:$0xff]
      %v797 = vld [vmem:[%s795 + $0x8] sm:$0xff]
      %v798 = vld [vmem:[%s795 + $0x10] sm:$0xff]
      %v799 = vld [vmem:[%s795 + $0x18] sm:$0xff]
      %v800 = vld [vmem:[%s795 + $0x20] sm:$0xff]
      %v801 = vld [vmem:[%s795 + $0x28] sm:$0xff]
      %v802 = vld [vmem:[%s795 + $0x30] sm:$0xff]
      %v803 = vld [vmem:[%s795 + $0x38] sm:$0xff]
      %v804 = vld [vmem:[%s795 + $0x40] sm:$0xff]
      %v805 = vld [vmem:[%s795 + $0x48] sm:$0xff]
      %v806 = vld [vmem:[%s795 + $0x50] sm:$0xff]
      %v807 = vld [vmem:[%s795 + $0x58] sm:$0xff]
      %v808 = vld [vmem:[%s795 + $0x60] sm:$0xff]
      %v809 = vld [vmem:[%s795 + $0x68] sm:$0xff]
      %v810 = vld [vmem:[%s795 + $0x70] sm:$0xff]
      %v811 = vld [vmem:[%s795 + $0x78] sm:$0xff]
      %812 = vrot.lane.b32.xlu0 %v324, 126
      %v813 = vpop.permute.xlu0 %812
      %814 = vrot.lane.b32.xlu0 %v325, 126
      %v815 = vpop.permute.xlu0 %814
      %vm816 = vcmask 1031168
      %v817 = vsel %vm816, %v813, %v815
      %v819 = vsel %vm367, %v796, 0
      %v822 = vsel %vm367, %v797, 0
      %v825 = vsel %vm367, %v798, 0
      %v828 = vsel %vm367, %v799, 0
      %v831 = vsel %vm367, %v800, 0
      %v834 = vsel %vm367, %v801, 0
      %v837 = vsel %vm367, %v802, 0
      %v840 = vsel %vm367, %v803, 0
      %v843 = vsel %vm367, %v804, 0
      %v846 = vsel %vm367, %v805, 0
      %v849 = vsel %vm367, %v806, 0
      %v852 = vsel %vm367, %v807, 0
      %v855 = vsel %vm367, %v808, 0
      %v858 = vsel %vm367, %v809, 0
      %v861 = vsel %vm367, %v810, 0
      %v864 = vsel %vm367, %v811, 0
      %v866 = vsel %vm416, %v817, 0
      %v868 = vsel %vm416, %v815, 0
      %870 = vmatprep.subr.mxu0 0.0
      %871 = vmatpush1.msra.mxu0 0.0
      %872 = vmatprep.subr.mxu0 0.0
      %873 = vmatpush1.msra.mxu0 0.0
      %874 = vmatprep.subr.mxu0 0.0
      %875 = vmatpush1.msra.mxu0 0.0
      %876 = vmatprep.subr.mxu0 0.0
      %877 = vmatpush1.msra.mxu0 0.0
      %878 = vmatprep.subr.mxu0 0.0
      %879 = vmatpush1.msra.mxu0 0.0
      %880 = vmatprep.subr.mxu0 0.0
      %881 = vmatpush1.msra.mxu0 0.0
      %882 = vmatprep.subr.mxu0 0.0
      %883 = vmatpush1.msra.mxu0 0.0
      %884 = vmatprep.subr.mxu0 0.0
      %885 = vmatpush1.msra.mxu0 0.0
      %886 = vmatprep.subr.mxu0 0.0
      %887 = vmatpush1.msra.mxu0 0.0
      %888 = vmatprep.subr.mxu0 0.0
      %889 = vmatpush1.msra.mxu0 0.0
      %890 = vmatprep.subr.mxu0 0.0
      %891 = vmatpush1.msra.mxu0 0.0
      %892 = vmatprep.subr.mxu0 0.0
      %893 = vmatpush1.msra.mxu0 0.0
      %894 = vmatprep.subr.mxu0 0.0
      %895 = vmatpush1.msra.mxu0 0.0
      %896 = vmatprep.subr.mxu0 0.0
      %897 = vmatpush1.msra.mxu0 0.0
      %898 = vmatprep.subr.mxu0 0.0
      %899 = vmatpush1.msra.mxu0 0.0
      %900 = vmatprep.subr.mxu0 %v868
      %901 = vmatpush1.msra.mxu0 %v866
      %902 = vmatprep.subr.mxu0 0.0
      %903 = vmatpush2.msra.mxu0 0.0
      %904 = vmatprep.subr.mxu0 0.0
      %905 = vmatpush2.msra.mxu0 0.0
      %906 = vmatprep.subr.mxu0 0.0
      %907 = vmatpush2.msra.mxu0 0.0
      %908 = vmatprep.subr.mxu0 0.0
      %909 = vmatpush2.msra.mxu0 0.0
      %910 = vmatprep.subr.mxu0 0.0
      %911 = vmatpush2.msra.mxu0 0.0
      %912 = vmatprep.subr.mxu0 0.0
      %913 = vmatpush2.msra.mxu0 0.0
      %914 = vmatprep.subr.mxu0 0.0
      %915 = vmatpush2.msra.mxu0 0.0
      %916 = vmatprep.subr.mxu0 0.0
      %917 = vmatpush2.msra.mxu0 0.0
      %918 = vmatprep.subr.mxu0 0.0
      %919 = vmatpush2.msra.mxu0 0.0
      %920 = vmatprep.subr.mxu0 0.0
      %921 = vmatpush2.msra.mxu0 0.0
      %922 = vmatprep.subr.mxu0 0.0
      %923 = vmatpush2.msra.mxu0 0.0
      %924 = vmatprep.subr.mxu0 0.0
      %925 = vmatpush2.msra.mxu0 0.0
      %926 = vmatprep.subr.mxu0 0.0
      %927 = vmatpush2.msra.mxu0 0.0
      %928 = vmatprep.subr.mxu0 0.0
      %929 = vmatpush2.msra.mxu0 0.0
      %930 = vmatprep.subr.mxu0 0.0
      %931 = vmatpush2.msra.mxu0 0.0
      %932 = vmatprep.subr.mxu0 0.0
      %933 = vmatpush2.msra.mxu0 0.0
      %934 = vmatprep.mubr.f32.mxu0 0.0
      %935 = vmatmul.mubr.f32.gmra.mxu0 %v819
      %v936 = vpop.f32.mrf.mxu0
      %v937 = vadd.f32 0.0, %v936
      %v938 = vpop.f32.mrf.mxu0
      %v939 = vadd.f32 0.0, %v938
      %940 = vmatprep.mubr.f32.mxu0 0.0
      %941 = vmatmul.mubr.f32.gmra.mxu0 %v822
      %v942 = vpop.f32.mrf.mxu0
      %v943 = vadd.f32 0.0, %v942
      %v944 = vpop.f32.mrf.mxu0
      %v945 = vadd.f32 0.0, %v944
      %946 = vmatprep.mubr.f32.mxu0 0.0
      %947 = vmatmul.mubr.f32.gmra.mxu0 %v825
      %v948 = vpop.f32.mrf.mxu0
      %v949 = vadd.f32 0.0, %v948
      %v950 = vpop.f32.mrf.mxu0
      %v951 = vadd.f32 0.0, %v950
      %952 = vmatprep.mubr.f32.mxu0 0.0
      %953 = vmatmul.mubr.f32.gmra.mxu0 %v828
      %v954 = vpop.f32.mrf.mxu0
      %v955 = vadd.f32 0.0, %v954
      %v956 = vpop.f32.mrf.mxu0
      %v957 = vadd.f32 0.0, %v956
      %958 = vmatprep.mubr.f32.mxu0 0.0
      %959 = vmatmul.mubr.f32.gmra.mxu0 %v831
      %v960 = vpop.f32.mrf.mxu0
      %v961 = vadd.f32 0.0, %v960
      %v962 = vpop.f32.mrf.mxu0
      %v963 = vadd.f32 0.0, %v962
      %964 = vmatprep.mubr.f32.mxu0 0.0
      %965 = vmatmul.mubr.f32.gmra.mxu0 %v834
      %v966 = vpop.f32.mrf.mxu0
      %v967 = vadd.f32 0.0, %v966
      %v968 = vpop.f32.mrf.mxu0
      %v969 = vadd.f32 0.0, %v968
      %970 = vmatprep.mubr.f32.mxu0 0.0
      %971 = vmatmul.mubr.f32.gmra.mxu0 %v837
      %v972 = vpop.f32.mrf.mxu0
      %v973 = vadd.f32 0.0, %v972
      %v974 = vpop.f32.mrf.mxu0
      %v975 = vadd.f32 0.0, %v974
      %976 = vmatprep.mubr.f32.mxu0 0.0
      %977 = vmatmul.mubr.f32.gmra.mxu0 %v840
      %v978 = vpop.f32.mrf.mxu0
      %v979 = vadd.f32 0.0, %v978
      %v980 = vpop.f32.mrf.mxu0
      %v981 = vadd.f32 0.0, %v980
      %982 = vmatprep.mubr.f32.mxu0 0.0
      %983 = vmatmul.mubr.f32.gmra.mxu0 %v843
      %v984 = vpop.f32.mrf.mxu0
      %v985 = vadd.f32 0.0, %v984
      %v986 = vpop.f32.mrf.mxu0
      %v987 = vadd.f32 0.0, %v986
      %988 = vmatprep.mubr.f32.mxu0 0.0
      %989 = vmatmul.mubr.f32.gmra.mxu0 %v846
      %v990 = vpop.f32.mrf.mxu0
      %v991 = vadd.f32 0.0, %v990
      %v992 = vpop.f32.mrf.mxu0
      %v993 = vadd.f32 0.0, %v992
      %994 = vmatprep.mubr.f32.mxu0 0.0
      %995 = vmatmul.mubr.f32.gmra.mxu0 %v849
      %v996 = vpop.f32.mrf.mxu0
      %v997 = vadd.f32 0.0, %v996
      %v998 = vpop.f32.mrf.mxu0
      %v999 = vadd.f32 0.0, %v998
      %1000 = vmatprep.mubr.f32.mxu0 0.0
      %1001 = vmatmul.mubr.f32.gmra.mxu0 %v852
      %v1002 = vpop.f32.mrf.mxu0
      %v1003 = vadd.f32 0.0, %v1002
      %v1004 = vpop.f32.mrf.mxu0
      %v1005 = vadd.f32 0.0, %v1004
      %1006 = vmatprep.mubr.f32.mxu0 0.0
      %1007 = vmatmul.mubr.f32.gmra.mxu0 %v855
      %v1008 = vpop.f32.mrf.mxu0
      %v1009 = vadd.f32 0.0, %v1008
      %v1010 = vpop.f32.mrf.mxu0
      %v1011 = vadd.f32 0.0, %v1010
      %1012 = vmatprep.mubr.f32.mxu0 0.0
      %1013 = vmatmul.mubr.f32.gmra.mxu0 %v858
      %v1014 = vpop.f32.mrf.mxu0
      %v1015 = vadd.f32 0.0, %v1014
      %v1016 = vpop.f32.mrf.mxu0
      %v1017 = vadd.f32 0.0, %v1016
      %1018 = vmatprep.mubr.f32.mxu0 0.0
      %1019 = vmatmul.mubr.f32.gmra.mxu0 %v861
      %v1020 = vpop.f32.mrf.mxu0
      %v1021 = vadd.f32 0.0, %v1020
      %v1022 = vpop.f32.mrf.mxu0
      %v1023 = vadd.f32 0.0, %v1022
      %1024 = vmatprep.mubr.f32.mxu0 0.0
      %1025 = vmatmul.mubr.f32.gmra.mxu0 %v864
      %v1026 = vpop.f32.mrf.mxu0
      %v1027 = vadd.f32 0.0, %v1026
      %v1028 = vpop.f32.mrf.mxu0
      %v1029 = vadd.f32 0.0, %v1028
      %1030 = vdwg.mxu0
      %v1031 = vadd.f32 %v701, %v937
      %v1032 = vadd.f32 %v703, %v939
      %v1033 = vadd.f32 %v707, %v943
      %v1034 = vadd.f32 %v709, %v945
      %v1035 = vadd.f32 %v713, %v949
      %v1036 = vadd.f32 %v715, %v951
      %v1037 = vadd.f32 %v719, %v955
      %v1038 = vadd.f32 %v721, %v957
      %v1039 = vadd.f32 %v725, %v961
      %v1040 = vadd.f32 %v727, %v963
      %v1041 = vadd.f32 %v731, %v967
      %v1042 = vadd.f32 %v733, %v969
      %v1043 = vadd.f32 %v737, %v973
      %v1044 = vadd.f32 %v739, %v975
      %v1045 = vadd.f32 %v743, %v979
      %v1046 = vadd.f32 %v745, %v981
      %v1047 = vadd.f32 %v749, %v985
      %v1048 = vadd.f32 %v751, %v987
      %v1049 = vadd.f32 %v755, %v991
      %v1050 = vadd.f32 %v757, %v993
      %v1051 = vadd.f32 %v761, %v997
      %v1052 = vadd.f32 %v763, %v999
      %v1053 = vadd.f32 %v767, %v1003
      %v1054 = vadd.f32 %v769, %v1005
      %v1055 = vadd.f32 %v773, %v1009
      %v1056 = vadd.f32 %v775, %v1011
      %v1057 = vadd.f32 %v779, %v1015
      %v1058 = vadd.f32 %v781, %v1017
      %v1059 = vadd.f32 %v785, %v1021
      %v1060 = vadd.f32 %v787, %v1023
      %v1061 = vadd.f32 %v791, %v1027
      %v1062 = vadd.f32 %v793, %v1029
      %v1063 = vld [vmem:[%s4] sm:$0xff]
      %v1064 = vld [vmem:[%s4 + $0x8] sm:$0xff]
      %v1065 = vld [vmem:[%s4 + $0x10] sm:$0xff]
      %v1066 = vld [vmem:[%s4 + $0x18] sm:$0xff]
      %v1067 = vld [vmem:[%s4 + $0x20] sm:$0xff]
      %v1068 = vld [vmem:[%s4 + $0x28] sm:$0xff]
      %v1069 = vld [vmem:[%s4 + $0x30] sm:$0xff]
      %v1070 = vld [vmem:[%s4 + $0x38] sm:$0xff]
      %v1071 = vld [vmem:[%s4 + $0x40] sm:$0xff]
      %v1072 = vld [vmem:[%s4 + $0x48] sm:$0xff]
      %v1073 = vld [vmem:[%s4 + $0x50] sm:$0xff]
      %v1074 = vld [vmem:[%s4 + $0x58] sm:$0xff]
      %v1075 = vld [vmem:[%s4 + $0x60] sm:$0xff]
      %v1076 = vld [vmem:[%s4 + $0x68] sm:$0xff]
      %v1077 = vld [vmem:[%s4 + $0x70] sm:$0xff]
      %v1078 = vld [vmem:[%s4 + $0x78] sm:$0xff]
      %1080 = vset.pattern.permute.xlu0 0
      %1081 = vperm.xlu0 %1080, %v1063
      %v1082 = vpop.permute.xlu0 %1081
      %1085 = vset.pattern.permute.xlu0 0
      %1086 = vperm.xlu0 %1085, %v1064
      %v1087 = vpop.permute.xlu0 %1086
      %1090 = vset.pattern.permute.xlu0 0
      %1091 = vperm.xlu0 %1090, %v1065
      %v1092 = vpop.permute.xlu0 %1091
      %1095 = vset.pattern.permute.xlu0 0
      %1096 = vperm.xlu0 %1095, %v1066
      %v1097 = vpop.permute.xlu0 %1096
      %1100 = vset.pattern.permute.xlu0 0
      %1101 = vperm.xlu0 %1100, %v1067
      %v1102 = vpop.permute.xlu0 %1101
      %1105 = vset.pattern.permute.xlu0 0
      %1106 = vperm.xlu0 %1105, %v1068
      %v1107 = vpop.permute.xlu0 %1106
      %1110 = vset.pattern.permute.xlu0 0
      %1111 = vperm.xlu0 %1110, %v1069
      %v1112 = vpop.permute.xlu0 %1111
      %1115 = vset.pattern.permute.xlu0 0
      %1116 = vperm.xlu0 %1115, %v1070
      %v1117 = vpop.permute.xlu0 %1116
      %1120 = vset.pattern.permute.xlu0 0
      %1121 = vperm.xlu0 %1120, %v1071
      %v1122 = vpop.permute.xlu0 %1121
      %1125 = vset.pattern.permute.xlu0 0
      %1126 = vperm.xlu0 %1125, %v1072
      %v1127 = vpop.permute.xlu0 %1126
      %1130 = vset.pattern.permute.xlu0 0
      %1131 = vperm.xlu0 %1130, %v1073
      %v1132 = vpop.permute.xlu0 %1131
      %1135 = vset.pattern.permute.xlu0 0
      %1136 = vperm.xlu0 %1135, %v1074
      %v1137 = vpop.permute.xlu0 %1136
      %1140 = vset.pattern.permute.xlu0 0
      %1141 = vperm.xlu0 %1140, %v1075
      %v1142 = vpop.permute.xlu0 %1141
      %1145 = vset.pattern.permute.xlu0 0
      %1146 = vperm.xlu0 %1145, %v1076
      %v1147 = vpop.permute.xlu0 %1146
      %1150 = vset.pattern.permute.xlu0 0
      %1151 = vperm.xlu0 %1150, %v1077
      %v1152 = vpop.permute.xlu0 %1151
      %1155 = vset.pattern.permute.xlu0 0
      %1156 = vperm.xlu0 %1155, %v1078
      %v1157 = vpop.permute.xlu0 %1156
      %v1159 = vadd.f32 %v1031, %v1082
      %v1160 = vadd.f32 %v1032, %v1082
      %v1161 = vadd.f32 %v1033, %v1087
      %v1162 = vadd.f32 %v1034, %v1087
      %v1163 = vadd.f32 %v1035, %v1092
      %v1164 = vadd.f32 %v1036, %v1092
      %v1165 = vadd.f32 %v1037, %v1097
      %v1166 = vadd.f32 %v1038, %v1097
      %v1167 = vadd.f32 %v1039, %v1102
      %v1168 = vadd.f32 %v1040, %v1102
      %v1169 = vadd.f32 %v1041, %v1107
      %v1170 = vadd.f32 %v1042, %v1107
      %v1171 = vadd.f32 %v1043, %v1112
      %v1172 = vadd.f32 %v1044, %v1112
      %v1173 = vadd.f32 %v1045, %v1117
      %v1174 = vadd.f32 %v1046, %v1117
      %v1175 = vadd.f32 %v1047, %v1122
      %v1176 = vadd.f32 %v1048, %v1122
      %v1177 = vadd.f32 %v1049, %v1127
      %v1178 = vadd.f32 %v1050, %v1127
      %v1179 = vadd.f32 %v1051, %v1132
      %v1180 = vadd.f32 %v1052, %v1132
      %v1181 = vadd.f32 %v1053, %v1137
      %v1182 = vadd.f32 %v1054, %v1137
      %v1183 = vadd.f32 %v1055, %v1142
      %v1184 = vadd.f32 %v1056, %v1142
      %v1185 = vadd.f32 %v1057, %v1147
      %v1186 = vadd.f32 %v1058, %v1147
      %v1187 = vadd.f32 %v1059, %v1152
      %v1188 = vadd.f32 %v1060, %v1152
      %v1189 = vadd.f32 %v1061, %v1157
      %v1190 = vadd.f32 %v1062, %v1157
      %v1191 = vlaneseq
      %v1192 = vand.u32 %v1191, 127
      %v1193 = vadd.s32 %v1192, 128
      %s1194 = ssub.s32 %s321, 1
      %v1195 = vstv %s1194
      %v1196 = vadd.s32 %v1192, %v1195
      %v1197 = vadd.s32 %v1193, %v1195
      %vm1198 = vcmp.ge.s32.totalorder %v1196, 0
      %vm1199 = vcmp.ge.s32.totalorder %v1197, 0
      %vm1200 = vcmp.lt.s32.totalorder %v1196, 16
      %vm1201 = vcmp.lt.s32.totalorder %v1197, 16
      %vm1202 = vmand %vm1198, %vm1200
      %vm1203 = vmand %vm1199, %vm1201
      %v1204 = vmax.f32 %v1159, 0.0
      %v1205 = vmax.f32 %v1160, 0.0
      %v1206 = vmax.f32 %v1161, 0.0
      %v1207 = vmax.f32 %v1162, 0.0
      %v1208 = vmax.f32 %v1163, 0.0
      %v1209 = vmax.f32 %v1164, 0.0
      %v1210 = vmax.f32 %v1165, 0.0
      %v1211 = vmax.f32 %v1166, 0.0
      %v1212 = vmax.f32 %v1167, 0.0
      %v1213 = vmax.f32 %v1168, 0.0
      %v1214 = vmax.f32 %v1169, 0.0
      %v1215 = vmax.f32 %v1170, 0.0
      %v1216 = vmax.f32 %v1171, 0.0
      %v1217 = vmax.f32 %v1172, 0.0
      %v1218 = vmax.f32 %v1173, 0.0
      %v1219 = vmax.f32 %v1174, 0.0
      %v1220 = vmax.f32 %v1175, 0.0
      %v1221 = vmax.f32 %v1176, 0.0
      %v1222 = vmax.f32 %v1177, 0.0
      %v1223 = vmax.f32 %v1178, 0.0
      %v1224 = vmax.f32 %v1179, 0.0
      %v1225 = vmax.f32 %v1180, 0.0
      %v1226 = vmax.f32 %v1181, 0.0
      %v1227 = vmax.f32 %v1182, 0.0
      %v1228 = vmax.f32 %v1183, 0.0
      %v1229 = vmax.f32 %v1184, 0.0
      %v1230 = vmax.f32 %v1185, 0.0
      %v1231 = vmax.f32 %v1186, 0.0
      %v1232 = vmax.f32 %v1187, 0.0
      %v1233 = vmax.f32 %v1188, 0.0
      %v1234 = vmax.f32 %v1189, 0.0
      %v1235 = vmax.f32 %v1190, 0.0
      %v1236 = vsel %vm1202, 1, 0
      %v1237 = vsel %vm1203, 1, 0
      %vm1238 = vcmp.eq.s32.totalorder %v1236, 1
      %vm1239 = vcmp.eq.s32.totalorder %v1237, 1
      %v1240 = vsel %vm1238, %v1204, 0.0
      %v1241 = vsel %vm1239, %v1205, 0.0
      %v1242 = vsel %vm1238, %v1206, 0.0
      %v1243 = vsel %vm1239, %v1207, 0.0
      %v1244 = vsel %vm1238, %v1208, 0.0
      %v1245 = vsel %vm1239, %v1209, 0.0
      %v1246 = vsel %vm1238, %v1210, 0.0
      %v1247 = vsel %vm1239, %v1211, 0.0
      %v1248 = vsel %vm1238, %v1212, 0.0
      %v1249 = vsel %vm1239, %v1213, 0.0
      %v1250 = vsel %vm1238, %v1214, 0.0
      %v1251 = vsel %vm1239, %v1215, 0.0
      %v1252 = vsel %vm1238, %v1216, 0.0
      %v1253 = vsel %vm1239, %v1217, 0.0
      %v1254 = vsel %vm1238, %v1218, 0.0
      %v1255 = vsel %vm1239, %v1219, 0.0
      %v1256 = vsel %vm1238, %v1220, 0.0
      %v1257 = vsel %vm1239, %v1221, 0.0
      %v1258 = vsel %vm1238, %v1222, 0.0
      %v1259 = vsel %vm1239, %v1223, 0.0
      %v1260 = vsel %vm1238, %v1224, 0.0
      %v1261 = vsel %vm1239, %v1225, 0.0
      %v1262 = vsel %vm1238, %v1226, 0.0
      %v1263 = vsel %vm1239, %v1227, 0.0
      %v1264 = vsel %vm1238, %v1228, 0.0
      %v1265 = vsel %vm1239, %v1229, 0.0
      %v1266 = vsel %vm1238, %v1230, 0.0
      %v1267 = vsel %vm1239, %v1231, 0.0
      %v1268 = vsel %vm1238, %v1232, 0.0
      %v1269 = vsel %vm1239, %v1233, 0.0
      %v1270 = vsel %vm1238, %v1234, 0.0
      %v1271 = vsel %vm1239, %v1235, 0.0
      %1272 = vst [vmem:[#allocation2] sm:$0xff] %v1240
      %vm1273 = vcmask 15360
      %1274 = vst.msk [vmem:[#allocation2 + $0x8] sm:$0xff] %vm1273, %v1241
      %1275 = vst [vmem:[#allocation2 + $0x10] sm:$0xff] %v1242
      %1276 = vst.msk [vmem:[#allocation2 + $0x18] sm:$0xff] %vm1273, %v1243
      %1277 = vst [vmem:[#allocation2 + $0x20] sm:$0xff] %v1244
      %1278 = vst.msk [vmem:[#allocation2 + $0x28] sm:$0xff] %vm1273, %v1245
      %1279 = vst [vmem:[#allocation2 + $0x30] sm:$0xff] %v1246
      %1280 = vst.msk [vmem:[#allocation2 + $0x38] sm:$0xff] %vm1273, %v1247
      %1281 = vst [vmem:[#allocation2 + $0x40] sm:$0xff] %v1248
      %1282 = vst.msk [vmem:[#allocation2 + $0x48] sm:$0xff] %vm1273, %v1249
      %1283 = vst [vmem:[#allocation2 + $0x50] sm:$0xff] %v1250
      %1284 = vst.msk [vmem:[#allocation2 + $0x58] sm:$0xff] %vm1273, %v1251
      %1285 = vst [vmem:[#allocation2 + $0x60] sm:$0xff] %v1252
      %1286 = vst.msk [vmem:[#allocation2 + $0x68] sm:$0xff] %vm1273, %v1253
      %1287 = vst [vmem:[#allocation2 + $0x70] sm:$0xff] %v1254
      %1288 = vst.msk [vmem:[#allocation2 + $0x78] sm:$0xff] %vm1273, %v1255
      %1289 = vst [vmem:[#allocation2 + $0x80] sm:$0xff] %v1256
      %1290 = vst.msk [vmem:[#allocation2 + $0x88] sm:$0xff] %vm1273, %v1257
      %1291 = vst [vmem:[#allocation2 + $0x90] sm:$0xff] %v1258
      %1292 = vst.msk [vmem:[#allocation2 + $0x98] sm:$0xff] %vm1273, %v1259
      %1293 = vst [vmem:[#allocation2 + $0xa0] sm:$0xff] %v1260
      %1294 = vst.msk [vmem:[#allocation2 + $0xa8] sm:$0xff] %vm1273, %v1261
      %1295 = vst [vmem:[#allocation2 + $0xb0] sm:$0xff] %v1262
      %1296 = vst.msk [vmem:[#allocation2 + $0xb8] sm:$0xff] %vm1273, %v1263
      %1297 = vst [vmem:[#allocation2 + $0xc0] sm:$0xff] %v1264
      %1298 = vst.msk [vmem:[#allocation2 + $0xc8] sm:$0xff] %vm1273, %v1265
      %1299 = vst [vmem:[#allocation2 + $0xd0] sm:$0xff] %v1266
      %1300 = vst.msk [vmem:[#allocation2 + $0xd8] sm:$0xff] %vm1273, %v1267
      %1301 = vst [vmem:[#allocation2 + $0xe0] sm:$0xff] %v1268
      %1302 = vst.msk [vmem:[#allocation2 + $0xe8] sm:$0xff] %vm1273, %v1269
      %1303 = vst [vmem:[#allocation2 + $0xf0] sm:$0xff] %v1270
      %1304 = vst.msk [vmem:[#allocation2 + $0xf8] sm:$0xff] %vm1273, %v1271
      %v1305 = vld [vmem:[%s3] sm:$0xff]
      %v1306 = vld [vmem:[%s3 + $0x8] sm:$0xff]
      %v1307 = vld [vmem:[%s3 + $0x10] sm:$0xff]
      %v1308 = vld [vmem:[%s3 + $0x18] sm:$0xff]
      %v1309 = vld [vmem:[#allocation2] sm:$0xff]
      %v1310 = vld [vmem:[#allocation2 + $0x10] sm:$0xff]
      %v1311 = vld [vmem:[#allocation2 + $0x20] sm:$0xff]
      %v1312 = vld [vmem:[#allocation2 + $0x30] sm:$0xff]
      %v1313 = vld [vmem:[#allocation2 + $0x40] sm:$0xff]
      %v1314 = vld [vmem:[#allocation2 + $0x50] sm:$0xff]
      %v1315 = vld [vmem:[#allocation2 + $0x60] sm:$0xff]
      %v1316 = vld [vmem:[#allocation2 + $0x70] sm:$0xff]
      %v1317 = vld [vmem:[#allocation2 + $0x80] sm:$0xff]
      %v1318 = vld [vmem:[#allocation2 + $0x90] sm:$0xff]
      %v1319 = vld [vmem:[#allocation2 + $0xa0] sm:$0xff]
      %v1320 = vld [vmem:[#allocation2 + $0xb0] sm:$0xff]
      %v1321 = vld [vmem:[#allocation2 + $0xc0] sm:$0xff]
      %v1322 = vld [vmem:[#allocation2 + $0xd0] sm:$0xff]
      %v1323 = vld [vmem:[#allocation2 + $0xe0] sm:$0xff]
      %v1324 = vld [vmem:[#allocation2 + $0xf0] sm:$0xff]
      %s1325 = scalar_lea.vmem %s3, 32
      %v1326 = vld [vmem:[%s1325] sm:$0xff]
      %v1327 = vld [vmem:[%s1325 + $0x8] sm:$0xff]
      %v1328 = vld [vmem:[%s1325 + $0x10] sm:$0xff]
      %v1329 = vld [vmem:[%s1325 + $0x18] sm:$0xff]
      %v1330 = vld [vmem:[#allocation2 + $0x8] sm:$0xff]
      %v1331 = vld [vmem:[#allocation2 + $0x18] sm:$0xff]
      %v1332 = vld [vmem:[#allocation2 + $0x28] sm:$0xff]
      %v1333 = vld [vmem:[#allocation2 + $0x38] sm:$0xff]
      %v1334 = vld [vmem:[#allocation2 + $0x48] sm:$0xff]
      %v1335 = vld [vmem:[#allocation2 + $0x58] sm:$0xff]
      %v1336 = vld [vmem:[#allocation2 + $0x68] sm:$0xff]
      %v1337 = vld [vmem:[#allocation2 + $0x78] sm:$0xff]
      %v1338 = vld [vmem:[#allocation2 + $0x88] sm:$0xff]
      %v1339 = vld [vmem:[#allocation2 + $0x98] sm:$0xff]
      %v1340 = vld [vmem:[#allocation2 + $0xa8] sm:$0xff]
      %v1341 = vld [vmem:[#allocation2 + $0xb8] sm:$0xff]
      %v1342 = vld [vmem:[#allocation2 + $0xc8] sm:$0xff]
      %v1343 = vld [vmem:[#allocation2 + $0xd8] sm:$0xff]
      %v1344 = vld [vmem:[#allocation2 + $0xe8] sm:$0xff]
      %v1345 = vld [vmem:[#allocation2 + $0xf8] sm:$0xff]
      %1378 = vrot.lane.b32.xlu0 %v1309, 127
      %v1379 = vpop.permute.xlu0 %1378
      %1380 = vrot.lane.b32.xlu0 %v1330, 127
      %v1381 = vpop.permute.xlu0 %1380
      %1382 = vrot.lane.b32.xlu0 %v1310, 127
      %v1383 = vpop.permute.xlu0 %1382
      %1384 = vrot.lane.b32.xlu0 %v1331, 127
      %v1385 = vpop.permute.xlu0 %1384
      %1386 = vrot.lane.b32.xlu0 %v1311, 127
      %v1387 = vpop.permute.xlu0 %1386
      %1388 = vrot.lane.b32.xlu0 %v1332, 127
      %v1389 = vpop.permute.xlu0 %1388
      %1390 = vrot.lane.b32.xlu0 %v1312, 127
      %v1391 = vpop.permute.xlu0 %1390
      %1392 = vrot.lane.b32.xlu0 %v1333, 127
      %v1393 = vpop.permute.xlu0 %1392
      %1394 = vrot.lane.b32.xlu0 %v1313, 127
      %v1395 = vpop.permute.xlu0 %1394
      %1396 = vrot.lane.b32.xlu0 %v1334, 127
      %v1397 = vpop.permute.xlu0 %1396
      %1398 = vrot.lane.b32.xlu0 %v1314, 127
      %v1399 = vpop.permute.xlu0 %1398
      %1400 = vrot.lane.b32.xlu0 %v1335, 127
      %v1401 = vpop.permute.xlu0 %1400
      %1402 = vrot.lane.b32.xlu0 %v1315, 127
      %v1403 = vpop.permute.xlu0 %1402
      %1404 = vrot.lane.b32.xlu0 %v1336, 127
      %v1405 = vpop.permute.xlu0 %1404
      %1406 = vrot.lane.b32.xlu0 %v1316, 127
      %v1407 = vpop.permute.xlu0 %1406
      %1408 = vrot.lane.b32.xlu0 %v1337, 127
      %v1409 = vpop.permute.xlu0 %1408
      %1410 = vrot.lane.b32.xlu0 %v1317, 127
      %v1411 = vpop.permute.xlu0 %1410
      %1412 = vrot.lane.b32.xlu0 %v1338, 127
      %v1413 = vpop.permute.xlu0 %1412
      %1414 = vrot.lane.b32.xlu0 %v1318, 127
      %v1415 = vpop.permute.xlu0 %1414
      %1416 = vrot.lane.b32.xlu0 %v1339, 127
      %v1417 = vpop.permute.xlu0 %1416
      %1418 = vrot.lane.b32.xlu0 %v1319, 127
      %v1419 = vpop.permute.xlu0 %1418
      %1420 = vrot.lane.b32.xlu0 %v1340, 127
      %v1421 = vpop.permute.xlu0 %1420
      %1422 = vrot.lane.b32.xlu0 %v1320, 127
      %v1423 = vpop.permute.xlu0 %1422
      %1424 = vrot.lane.b32.xlu0 %v1341, 127
      %v1425 = vpop.permute.xlu0 %1424
      %1426 = vrot.lane.b32.xlu0 %v1321, 127
      %v1427 = vpop.permute.xlu0 %1426
      %1428 = vrot.lane.b32.xlu0 %v1342, 127
      %v1429 = vpop.permute.xlu0 %1428
      %1430 = vrot.lane.b32.xlu0 %v1322, 127
      %v1431 = vpop.permute.xlu0 %1430
      %1432 = vrot.lane.b32.xlu0 %v1343, 127
      %v1433 = vpop.permute.xlu0 %1432
      %1434 = vrot.lane.b32.xlu0 %v1323, 127
      %v1435 = vpop.permute.xlu0 %1434
      %1436 = vrot.lane.b32.xlu0 %v1344, 127
      %v1437 = vpop.permute.xlu0 %1436
      %1438 = vrot.lane.b32.xlu0 %v1324, 127
      %v1439 = vpop.permute.xlu0 %1438
      %1440 = vrot.lane.b32.xlu0 %v1345, 127
      %v1441 = vpop.permute.xlu0 %1440
      %v1442 = vsel %vm365, %v1379, %v1381
      %v1443 = vsel %vm365, %v1383, %v1385
      %v1444 = vsel %vm365, %v1387, %v1389
      %v1445 = vsel %vm365, %v1391, %v1393
      %v1446 = vsel %vm365, %v1395, %v1397
      %v1447 = vsel %vm365, %v1399, %v1401
      %v1448 = vsel %vm365, %v1403, %v1405
      %v1449 = vsel %vm365, %v1407, %v1409
      %v1450 = vsel %vm365, %v1411, %v1413
      %v1451 = vsel %vm365, %v1415, %v1417
      %v1452 = vsel %vm365, %v1419, %v1421
      %v1453 = vsel %vm365, %v1423, %v1425
      %v1454 = vsel %vm365, %v1427, %v1429
      %v1455 = vsel %vm365, %v1431, %v1433
      %v1456 = vsel %vm365, %v1435, %v1437
      %v1457 = vsel %vm365, %v1439, %v1441
      %1474 = vmatprep.subr.mxu0 0.0
      %1475 = vmatpush1.msra.mxu0 %v1457
      %1476 = vmatprep.subr.mxu0 0.0
      %1477 = vmatpush1.msra.mxu0 %v1456
      %1478 = vmatprep.subr.mxu0 0.0
      %1479 = vmatpush1.msra.mxu0 %v1455
      %1480 = vmatprep.subr.mxu0 0.0
      %1481 = vmatpush1.msra.mxu0 %v1454
      %1482 = vmatprep.subr.mxu0 0.0
      %1483 = vmatpush1.msra.mxu0 %v1453
      %1484 = vmatprep.subr.mxu0 0.0
      %1485 = vmatpush1.msra.mxu0 %v1452
      %1486 = vmatprep.subr.mxu0 0.0
      %1487 = vmatpush1.msra.mxu0 %v1451
      %1488 = vmatprep.subr.mxu0 0.0
      %1489 = vmatpush1.msra.mxu0 %v1450
      %1490 = vmatprep.subr.mxu0 0.0
      %1491 = vmatpush1.msra.mxu0 %v1449
      %1492 = vmatprep.subr.mxu0 0.0
      %1493 = vmatpush1.msra.mxu0 %v1448
      %1494 = vmatprep.subr.mxu0 0.0
      %1495 = vmatpush1.msra.mxu0 %v1447
      %1496 = vmatprep.subr.mxu0 0.0
      %1497 = vmatpush1.msra.mxu0 %v1446
      %1498 = vmatprep.subr.mxu0 0.0
      %1499 = vmatpush1.msra.mxu0 %v1445
      %1500 = vmatprep.subr.mxu0 0.0
      %1501 = vmatpush1.msra.mxu0 %v1444
      %1502 = vmatprep.subr.mxu0 0.0
      %1503 = vmatpush1.msra.mxu0 %v1443
      %1504 = vmatprep.subr.mxu0 0.0
      %1505 = vmatpush1.msra.mxu0 %v1442
      %1506 = vmatprep.subr.mxu0 0.0
      %1507 = vmatpush2.msra.mxu0 0.0
      %1508 = vmatprep.subr.mxu0 0.0
      %1509 = vmatpush2.msra.mxu0 0.0
      %1510 = vmatprep.subr.mxu0 0.0
      %1511 = vmatpush2.msra.mxu0 0.0
      %1512 = vmatprep.subr.mxu0 0.0
      %1513 = vmatpush2.msra.mxu0 0.0
      %1514 = vmatprep.subr.mxu0 0.0
      %1515 = vmatpush2.msra.mxu0 0.0
      %1516 = vmatprep.subr.mxu0 0.0
      %1517 = vmatpush2.msra.mxu0 0.0
      %1518 = vmatprep.subr.mxu0 0.0
      %1519 = vmatpush2.msra.mxu0 0.0
      %1520 = vmatprep.subr.mxu0 0.0
      %1521 = vmatpush2.msra.mxu0 0.0
      %1522 = vmatprep.subr.mxu0 0.0
      %1523 = vmatpush2.msra.mxu0 0.0
      %1524 = vmatprep.subr.mxu0 0.0
      %1525 = vmatpush2.msra.mxu0 0.0
      %1526 = vmatprep.subr.mxu0 0.0
      %1527 = vmatpush2.msra.mxu0 0.0
      %1528 = vmatprep.subr.mxu0 0.0
      %1529 = vmatpush2.msra.mxu0 0.0
      %1530 = vmatprep.subr.mxu0 0.0
      %1531 = vmatpush2.msra.mxu0 0.0
      %1532 = vmatprep.subr.mxu0 0.0
      %1533 = vmatpush2.msra.mxu0 0.0
      %1534 = vmatprep.subr.mxu0 0.0
      %1535 = vmatpush2.msra.mxu0 0.0
      %1536 = vmatprep.subr.mxu0 0.0
      %1537 = vmatpush2.msra.mxu0 0.0
      %1538 = vmatprep.mubr.f32.mxu0 0.0
      %1539 = vmatmul.mubr.f32.gmra.mxu0 %v1326
      %v1540 = vpop.f32.mrf.mxu0
      %v1541 = vadd.f32 0.0, %v1540
      %v1542 = vpop.f32.mrf.mxu0
      %1543 = vmatprep.mubr.f32.mxu0 0.0
      %1544 = vmatmul.mubr.f32.gmra.mxu0 %v1327
      %v1545 = vpop.f32.mrf.mxu0
      %v1546 = vadd.f32 0.0, %v1545
      %v1547 = vpop.f32.mrf.mxu0
      %1548 = vmatprep.mubr.f32.mxu0 0.0
      %1549 = vmatmul.mubr.f32.gmra.mxu0 %v1328
      %v1550 = vpop.f32.mrf.mxu0
      %v1551 = vadd.f32 0.0, %v1550
      %v1552 = vpop.f32.mrf.mxu0
      %1553 = vmatprep.mubr.f32.mxu0 0.0
      %1554 = vmatmul.mubr.f32.gmra.mxu0 %v1329
      %v1555 = vpop.f32.mrf.mxu0
      %v1556 = vadd.f32 0.0, %v1555
      %v1557 = vpop.f32.mrf.mxu0
      %1558 = vdwg.mxu0
      %1559 = vmatprep.subr.mxu0 0.0
      %1560 = vmatpush1.msra.mxu0 %v1324
      %1561 = vmatprep.subr.mxu0 0.0
      %1562 = vmatpush1.msra.mxu0 %v1323
      %1563 = vmatprep.subr.mxu0 0.0
      %1564 = vmatpush1.msra.mxu0 %v1322
      %1565 = vmatprep.subr.mxu0 0.0
      %1566 = vmatpush1.msra.mxu0 %v1321
      %1567 = vmatprep.subr.mxu0 0.0
      %1568 = vmatpush1.msra.mxu0 %v1320
      %1569 = vmatprep.subr.mxu0 0.0
      %1570 = vmatpush1.msra.mxu0 %v1319
      %1571 = vmatprep.subr.mxu0 0.0
      %1572 = vmatpush1.msra.mxu0 %v1318
      %1573 = vmatprep.subr.mxu0 0.0
      %1574 = vmatpush1.msra.mxu0 %v1317
      %1575 = vmatprep.subr.mxu0 0.0
      %1576 = vmatpush1.msra.mxu0 %v1316
      %1577 = vmatprep.subr.mxu0 0.0
      %1578 = vmatpush1.msra.mxu0 %v1315
      %1579 = vmatprep.subr.mxu0 0.0
      %1580 = vmatpush1.msra.mxu0 %v1314
      %1581 = vmatprep.subr.mxu0 0.0
      %1582 = vmatpush1.msra.mxu0 %v1313
      %1583 = vmatprep.subr.mxu0 0.0
      %1584 = vmatpush1.msra.mxu0 %v1312
      %1585 = vmatprep.subr.mxu0 0.0
      %1586 = vmatpush1.msra.mxu0 %v1311
      %1587 = vmatprep.subr.mxu0 0.0
      %1588 = vmatpush1.msra.mxu0 %v1310
      %1589 = vmatprep.subr.mxu0 0.0
      %1590 = vmatpush1.msra.mxu0 %v1309
      %1591 = vmatprep.subr.mxu0 0.0
      %1592 = vmatpush2.msra.mxu0 0.0
      %1593 = vmatprep.subr.mxu0 0.0
      %1594 = vmatpush2.msra.mxu0 0.0
      %1595 = vmatprep.subr.mxu0 0.0
      %1596 = vmatpush2.msra.mxu0 0.0
      %1597 = vmatprep.subr.mxu0 0.0
      %1598 = vmatpush2.msra.mxu0 0.0
      %1599 = vmatprep.subr.mxu0 0.0
      %1600 = vmatpush2.msra.mxu0 0.0
      %1601 = vmatprep.subr.mxu0 0.0
      %1602 = vmatpush2.msra.mxu0 0.0
      %1603 = vmatprep.subr.mxu0 0.0
      %1604 = vmatpush2.msra.mxu0 0.0
      %1605 = vmatprep.subr.mxu0 0.0
      %1606 = vmatpush2.msra.mxu0 0.0
      %1607 = vmatprep.subr.mxu0 0.0
      %1608 = vmatpush2.msra.mxu0 0.0
      %1609 = vmatprep.subr.mxu0 0.0
      %1610 = vmatpush2.msra.mxu0 0.0
      %1611 = vmatprep.subr.mxu0 0.0
      %1612 = vmatpush2.msra.mxu0 0.0
      %1613 = vmatprep.subr.mxu0 0.0
      %1614 = vmatpush2.msra.mxu0 0.0
      %1615 = vmatprep.subr.mxu0 0.0
      %1616 = vmatpush2.msra.mxu0 0.0
      %1617 = vmatprep.subr.mxu0 0.0
      %1618 = vmatpush2.msra.mxu0 0.0
      %1619 = vmatprep.subr.mxu0 0.0
      %1620 = vmatpush2.msra.mxu0 0.0
      %1621 = vmatprep.subr.mxu0 0.0
      %1622 = vmatpush2.msra.mxu0 0.0
      %1623 = vmatprep.mubr.f32.mxu0 0.0
      %1624 = vmatmul.mubr.f32.gmra.mxu0 %v1305
      %v1625 = vpop.f32.mrf.mxu0
      %v1626 = vadd.f32 %v1541, %v1625
      %v1627 = vpop.f32.mrf.mxu0
      %1628 = vmatprep.mubr.f32.mxu0 0.0
      %1629 = vmatmul.mubr.f32.gmra.mxu0 %v1306
      %v1630 = vpop.f32.mrf.mxu0
      %v1631 = vadd.f32 %v1546, %v1630
      %v1632 = vpop.f32.mrf.mxu0
      %1633 = vmatprep.mubr.f32.mxu0 0.0
      %1634 = vmatmul.mubr.f32.gmra.mxu0 %v1307
      %v1635 = vpop.f32.mrf.mxu0
      %v1636 = vadd.f32 %v1551, %v1635
      %v1637 = vpop.f32.mrf.mxu0
      %1638 = vmatprep.mubr.f32.mxu0 0.0
      %1639 = vmatmul.mubr.f32.gmra.mxu0 %v1308
      %v1640 = vpop.f32.mrf.mxu0
      %v1641 = vadd.f32 %v1556, %v1640
      %v1642 = vpop.f32.mrf.mxu0
      %1643 = vdwg.mxu0
      %s1644 = scalar_lea.vmem %s3, 64
      %v1645 = vld [vmem:[%s1644] sm:$0xff]
      %v1646 = vld [vmem:[%s1644 + $0x8] sm:$0xff]
      %v1647 = vld [vmem:[%s1644 + $0x10] sm:$0xff]
      %v1648 = vld [vmem:[%s1644 + $0x18] sm:$0xff]
      %1649 = vrot.lane.b32.xlu0 %v1309, 126
      %v1650 = vpop.permute.xlu0 %1649
      %1651 = vrot.lane.b32.xlu0 %v1330, 126
      %v1652 = vpop.permute.xlu0 %1651
      %1653 = vrot.lane.b32.xlu0 %v1310, 126
      %v1654 = vpop.permute.xlu0 %1653
      %1655 = vrot.lane.b32.xlu0 %v1331, 126
      %v1656 = vpop.permute.xlu0 %1655
      %1657 = vrot.lane.b32.xlu0 %v1311, 126
      %v1658 = vpop.permute.xlu0 %1657
      %1659 = vrot.lane.b32.xlu0 %v1332, 126
      %v1660 = vpop.permute.xlu0 %1659
      %1661 = vrot.lane.b32.xlu0 %v1312, 126
      %v1662 = vpop.permute.xlu0 %1661
      %1663 = vrot.lane.b32.xlu0 %v1333, 126
      %v1664 = vpop.permute.xlu0 %1663
      %1665 = vrot.lane.b32.xlu0 %v1313, 126
      %v1666 = vpop.permute.xlu0 %1665
      %1667 = vrot.lane.b32.xlu0 %v1334, 126
      %v1668 = vpop.permute.xlu0 %1667
      %1669 = vrot.lane.b32.xlu0 %v1314, 126
      %v1670 = vpop.permute.xlu0 %1669
      %1671 = vrot.lane.b32.xlu0 %v1335, 126
      %v1672 = vpop.permute.xlu0 %1671
      %1673 = vrot.lane.b32.xlu0 %v1315, 126
      %v1674 = vpop.permute.xlu0 %1673
      %1675 = vrot.lane.b32.xlu0 %v1336, 126
      %v1676 = vpop.permute.xlu0 %1675
      %1677 = vrot.lane.b32.xlu0 %v1316, 126
      %v1678 = vpop.permute.xlu0 %1677
      %1679 = vrot.lane.b32.xlu0 %v1337, 126
      %v1680 = vpop.permute.xlu0 %1679
      %1681 = vrot.lane.b32.xlu0 %v1317, 126
      %v1682 = vpop.permute.xlu0 %1681
      %1683 = vrot.lane.b32.xlu0 %v1338, 126
      %v1684 = vpop.permute.xlu0 %1683
      %1685 = vrot.lane.b32.xlu0 %v1318, 126
      %v1686 = vpop.permute.xlu0 %1685
      %1687 = vrot.lane.b32.xlu0 %v1339, 126
      %v1688 = vpop.permute.xlu0 %1687
      %1689 = vrot.lane.b32.xlu0 %v1319, 126
      %v1690 = vpop.permute.xlu0 %1689
      %1691 = vrot.lane.b32.xlu0 %v1340, 126
      %v1692 = vpop.permute.xlu0 %1691
      %1693 = vrot.lane.b32.xlu0 %v1320, 126
      %v1694 = vpop.permute.xlu0 %1693
      %1695 = vrot.lane.b32.xlu0 %v1341, 126
      %v1696 = vpop.permute.xlu0 %1695
      %1697 = vrot.lane.b32.xlu0 %v1321, 126
      %v1698 = vpop.permute.xlu0 %1697
      %1699 = vrot.lane.b32.xlu0 %v1342, 126
      %v1700 = vpop.permute.xlu0 %1699
      %1701 = vrot.lane.b32.xlu0 %v1322, 126
      %v1702 = vpop.permute.xlu0 %1701
      %1703 = vrot.lane.b32.xlu0 %v1343, 126
      %v1704 = vpop.permute.xlu0 %1703
      %1705 = vrot.lane.b32.xlu0 %v1323, 126
      %v1706 = vpop.permute.xlu0 %1705
      %1707 = vrot.lane.b32.xlu0 %v1344, 126
      %v1708 = vpop.permute.xlu0 %1707
      %1709 = vrot.lane.b32.xlu0 %v1324, 126
      %v1710 = vpop.permute.xlu0 %1709
      %1711 = vrot.lane.b32.xlu0 %v1345, 126
      %v1712 = vpop.permute.xlu0 %1711
      %v1713 = vsel %vm816, %v1650, %v1652
      %v1714 = vsel %vm816, %v1654, %v1656
      %v1715 = vsel %vm816, %v1658, %v1660
      %v1716 = vsel %vm816, %v1662, %v1664
      %v1717 = vsel %vm816, %v1666, %v1668
      %v1718 = vsel %vm816, %v1670, %v1672
      %v1719 = vsel %vm816, %v1674, %v1676
      %v1720 = vsel %vm816, %v1678, %v1680
      %v1721 = vsel %vm816, %v1682, %v1684
      %v1722 = vsel %vm816, %v1686, %v1688
      %v1723 = vsel %vm816, %v1690, %v1692
      %v1724 = vsel %vm816, %v1694, %v1696
      %v1725 = vsel %vm816, %v1698, %v1700
      %v1726 = vsel %vm816, %v1702, %v1704
      %v1727 = vsel %vm816, %v1706, %v1708
      %v1728 = vsel %vm816, %v1710, %v1712
      %1745 = vmatprep.subr.mxu0 0.0
      %1746 = vmatpush1.msra.mxu0 %v1728
      %1747 = vmatprep.subr.mxu0 0.0
      %1748 = vmatpush1.msra.mxu0 %v1727
      %1749 = vmatprep.subr.mxu0 0.0
      %1750 = vmatpush1.msra.mxu0 %v1726
      %1751 = vmatprep.subr.mxu0 0.0
      %1752 = vmatpush1.msra.mxu0 %v1725
      %1753 = vmatprep.subr.mxu0 0.0
      %1754 = vmatpush1.msra.mxu0 %v1724
      %1755 = vmatprep.subr.mxu0 0.0
      %1756 = vmatpush1.msra.mxu0 %v1723
      %1757 = vmatprep.subr.mxu0 0.0
      %1758 = vmatpush1.msra.mxu0 %v1722
      %1759 = vmatprep.subr.mxu0 0.0
      %1760 = vmatpush1.msra.mxu0 %v1721
      %1761 = vmatprep.subr.mxu0 0.0
      %1762 = vmatpush1.msra.mxu0 %v1720
      %1763 = vmatprep.subr.mxu0 0.0
      %1764 = vmatpush1.msra.mxu0 %v1719
      %1765 = vmatprep.subr.mxu0 0.0
      %1766 = vmatpush1.msra.mxu0 %v1718
      %1767 = vmatprep.subr.mxu0 0.0
      %1768 = vmatpush1.msra.mxu0 %v1717
      %1769 = vmatprep.subr.mxu0 0.0
      %1770 = vmatpush1.msra.mxu0 %v1716
      %1771 = vmatprep.subr.mxu0 0.0
      %1772 = vmatpush1.msra.mxu0 %v1715
      %1773 = vmatprep.subr.mxu0 0.0
      %1774 = vmatpush1.msra.mxu0 %v1714
      %1775 = vmatprep.subr.mxu0 0.0
      %1776 = vmatpush1.msra.mxu0 %v1713
      %1777 = vmatprep.subr.mxu0 0.0
      %1778 = vmatpush2.msra.mxu0 0.0
      %1779 = vmatprep.subr.mxu0 0.0
      %1780 = vmatpush2.msra.mxu0 0.0
      %1781 = vmatprep.subr.mxu0 0.0
      %1782 = vmatpush2.msra.mxu0 0.0
      %1783 = vmatprep.subr.mxu0 0.0
      %1784 = vmatpush2.msra.mxu0 0.0
      %1785 = vmatprep.subr.mxu0 0.0
      %1786 = vmatpush2.msra.mxu0 0.0
      %1787 = vmatprep.subr.mxu0 0.0
      %1788 = vmatpush2.msra.mxu0 0.0
      %1789 = vmatprep.subr.mxu0 0.0
      %1790 = vmatpush2.msra.mxu0 0.0
      %1791 = vmatprep.subr.mxu0 0.0
      %1792 = vmatpush2.msra.mxu0 0.0
      %1793 = vmatprep.subr.mxu0 0.0
      %1794 = vmatpush2.msra.mxu0 0.0
      %1795 = vmatprep.subr.mxu0 0.0
      %1796 = vmatpush2.msra.mxu0 0.0
      %1797 = vmatprep.subr.mxu0 0.0
      %1798 = vmatpush2.msra.mxu0 0.0
      %1799 = vmatprep.subr.mxu0 0.0
      %1800 = vmatpush2.msra.mxu0 0.0
      %1801 = vmatprep.subr.mxu0 0.0
      %1802 = vmatpush2.msra.mxu0 0.0
      %1803 = vmatprep.subr.mxu0 0.0
      %1804 = vmatpush2.msra.mxu0 0.0
      %1805 = vmatprep.subr.mxu0 0.0
      %1806 = vmatpush2.msra.mxu0 0.0
      %1807 = vmatprep.subr.mxu0 0.0
      %1808 = vmatpush2.msra.mxu0 0.0
      %1809 = vmatprep.mubr.f32.mxu0 0.0
      %1810 = vmatmul.mubr.f32.gmra.mxu0 %v1645
      %v1811 = vpop.f32.mrf.mxu0
      %v1812 = vadd.f32 0.0, %v1811
      %v1813 = vpop.f32.mrf.mxu0
      %1814 = vmatprep.mubr.f32.mxu0 0.0
      %1815 = vmatmul.mubr.f32.gmra.mxu0 %v1646
      %v1816 = vpop.f32.mrf.mxu0
      %v1817 = vadd.f32 0.0, %v1816
      %v1818 = vpop.f32.mrf.mxu0
      %1819 = vmatprep.mubr.f32.mxu0 0.0
      %1820 = vmatmul.mubr.f32.gmra.mxu0 %v1647
      %v1821 = vpop.f32.mrf.mxu0
      %v1822 = vadd.f32 0.0, %v1821
      %v1823 = vpop.f32.mrf.mxu0
      %1824 = vmatprep.mubr.f32.mxu0 0.0
      %1825 = vmatmul.mubr.f32.gmra.mxu0 %v1648
      %v1826 = vpop.f32.mrf.mxu0
      %v1827 = vadd.f32 0.0, %v1826
      %v1828 = vpop.f32.mrf.mxu0
      %1829 = vdwg.mxu0
      %v1830 = vadd.f32 %v1626, %v1812
      %v1831 = vadd.f32 %v1631, %v1817
      %v1832 = vadd.f32 %v1636, %v1822
      %v1833 = vadd.f32 %v1641, %v1827
      %v1834 = vld [vmem:[%s5] sm:$0xff]
      %v1835 = vld [vmem:[%s5 + $0x8] sm:$0xff]
      %v1836 = vld [vmem:[%s5 + $0x10] sm:$0xff]
      %v1837 = vld [vmem:[%s5 + $0x18] sm:$0xff]
      %1839 = vset.pattern.permute.xlu0 0
      %1840 = vperm.xlu0 %1839, %v1834
      %v1841 = vpop.permute.xlu0 %1840
      %1844 = vset.pattern.permute.xlu0 0
      %1845 = vperm.xlu0 %1844, %v1835
      %v1846 = vpop.permute.xlu0 %1845
      %1849 = vset.pattern.permute.xlu0 0
      %1850 = vperm.xlu0 %1849, %v1836
      %v1851 = vpop.permute.xlu0 %1850
      %1854 = vset.pattern.permute.xlu0 0
      %1855 = vperm.xlu0 %1854, %v1837
      %v1856 = vpop.permute.xlu0 %1855
      %v1858 = vadd.f32 %v1830, %v1841
      %v1859 = vadd.f32 %v1831, %v1846
      %v1860 = vadd.f32 %v1832, %v1851
      %v1861 = vadd.f32 %v1833, %v1856
      %1864 = vrot.lane.b32.xlu0 %v322, 126
      %v1865 = vpop.permute.xlu0 %1864
      %1866 = vrot.lane.b32.xlu0 %v323, 126
      %v1867 = vpop.permute.xlu0 %1866
      %v1868 = vsel %vm816, %v1865, %v1867
      %1870 = vst [vmem:[%s320] sm:$0xff] %v1858
      %1871 = vst [vmem:[%s320 + $0x8] sm:$0xff] %v1859
      %1872 = vst [vmem:[%s320 + $0x10] sm:$0xff] %v1860
      %1873 = vst [vmem:[%s320 + $0x18] sm:$0xff] %v1861
      %1874 = vst [vmem:[%s320 + $0x20] sm:$0xf] %v1868
      %p1875 = scmp.lt.s32.totalorder %s21, 1
      %s1876 = scalar_select %p1875, %s21, 1
      %p1877 = scmp.lt.s32.totalorder %s22, 0
      %s1878 = scalar_select %p1877, %s22, 0
      %s1879 = smul.addr %s1876, 5
      %s1880 = sadd.s32 %s1878, %s1879
      %s1881 = smul.addr %s1880, 8
      %s1882 = scalar_lea.vmem %s6, %s1881
      // Predicated region
      $region45: #{tpu_custom_call.1} parent=43 // pred_check
        %p1883 = pneg %p191
      $region46: #{tpu_custom_call.1} parent=43 // pred_check_branch
        %1885 = sbr.rel (%p1883) target = $region48
      $region47: #{tpu_custom_call.1} parent=43 // pred_region
        _
      $region48: #{tpu_custom_call.1} parent=43 // pred_fallthru
        _
    $region44: #{tpu_custom_call.1} parent=5 // pred_fallthru
      _
    %p1886 = scmp.le.s32.totalorder 2, %s12
    // Predicated region
    $region49: #{tpu_custom_call.1} parent=5 // pred_check
      %p1887 = pneg %p1886
    $region50: #{tpu_custom_call.1} parent=5 // pred_check_branch
      %1889 = sbr.rel (%p1887) target = $region52
    $region51: #{tpu_custom_call.1} parent=5 // pred_region
      %s1890 = ssub.s32 %s12, 2
      // Predicated region
      $region53: #{tpu_custom_call.1} parent=51 // pred_check
        %p1891 = pneg %p197
      $region54: #{tpu_custom_call.1} parent=51 // pred_check_branch
        %1893 = sbr.rel (%p1891) target = $region56
      $region55: #{tpu_custom_call.1} parent=51 // pred_region
        %p1894 = scmp.lt.s32.totalorder %s23, 1
        %s1895 = scalar_select %p1894, %s23, 1
        %p1896 = scmp.lt.s32.totalorder %s24, 0
        %s1897 = scalar_select %p1896, %s24, 0
        %s1898 = smul.addr %s1895, 5
        %s1899 = sadd.s32 %s1897, %s1898
        %s1900 = smul.addr %s1899, 8
        %s1901 = scalar_lea.vmem %s6, %s1900
      $region56: #{tpu_custom_call.1} parent=51 // pred_fallthru
        _
    $region52: #{tpu_custom_call.1} parent=5 // pred_fallthru
      _
  $region6: #{tpu_custom_call.1} parent=0 // loop_footer
    %s16 = sadd.s32 1, %s12
  $region7: #{tpu_custom_call.1} parent=0 // loop_footer_branch
    %11 = sbr.rel target = $region3
  $region8: #{tpu_custom_call.1} parent=0 // loop_exit
    _

</llo_original>
